<compile_context>
chip_gen: v6e
topology: v6e:2x2x1
jax: 0.10.0
libtpu: 0.0.40
codegen_flags: <defaults>
</compile_context>

<pallas_src>
import functools
import math

import jax
import jax.numpy as jnp
from jax.experimental import pallas as pl
from jax.experimental.pallas import tpu as pltpu


def _layernorm(x, gamma, beta, eps=1e-5):
    mu = jnp.mean(x, axis=-1, keepdims=True)
    var = jnp.mean((x - mu) ** 2, axis=-1, keepdims=True)
    return (x - mu) * jax.lax.rsqrt(var + eps) * gamma + beta


def encoder_kernel(
    x_ref,        # (BT, L, C_in)            input block (batch tile)
    w_in_ref,     # (C_in, D)   bf16         project_in weight (pre-transposed)
    b_in_ref,     # (1, D)      f32
    qkv_w_ref,    # (1, D, 3D)  bf16         current layer's fused QKV weight
    qkv_b_ref,    # (1, 1, 3D)  f32
    out_w_ref,    # (1, D, D)   bf16
    out_b_ref,    # (1, 1, D)   f32
    ln1_g_ref,    # (1, 1, D)   f32
    ln1_b_ref,    # (1, 1, D)   f32
    lin1_w_ref,   # (1, D, FF)  bf16
    lin1_b_ref,   # (1, 1, FF)  f32
    lin2_w_ref,   # (1, FF, D)  bf16
    lin2_b_ref,   # (1, 1, D)   f32
    ln2_g_ref,    # (1, 1, D)   f32
    ln2_b_ref,    # (1, 1, D)   f32
    w_out_ref,    # (D, C_in)   bf16
    b_out_ref,    # (1, C_in)   f32
    o_ref,        # (BT, L, C_in)            output block (written at last layer)
    h_ref,        # (BT*L, D)   f32 scratch  activation carried across layers
    *,
    nhead: int,
    compute_dtype,
):
    layer = pl.program_id(1)
    BT, L, C_in = x_ref.shape
    D = w_in_ref.shape[1]
    hd = D // nhead
    M = BT * L
    scale = 1.0 / math.sqrt(hd)

    def c(a):  # matmul-input cast (MXU), accumulation stays f32
        return a.astype(compute_dtype)

    # ---- project_in (Conv1d, kernel_size=1), first layer step only -----------
    @pl.when(layer == 0)
    def _():
        xf = x_ref[...].reshape(M, C_in)
        h0 = jnp.dot(c(xf), w_in_ref[...], preferred_element_type=jnp.float32)
        h_ref[...] = h0 + b_in_ref[...].astype(jnp.float32)

    h = h_ref[...]                                              # (M, D) f32

    # ---- Multi-head self-attention -------------------------------------------
    # Fused QKV projection: one (M, D) @ (D, 3D) matmul.
    qkv = jnp.dot(c(h), qkv_w_ref[0], preferred_element_type=jnp.float32)
    qkv = (qkv + qkv_b_ref[0].astype(jnp.float32)).reshape(BT, L, 3 * D)

    head_outs = []
    for hh in range(nhead):
        qh = qkv[:, :, 0 * D + hh * hd: 0 * D + (hh + 1) * hd]  # (BT, L, hd)
        kh = qkv[:, :, 1 * D + hh * hd: 1 * D + (hh + 1) * hd]
        vh = qkv[:, :, 2 * D + hh * hd: 2 * D + (hh + 1) * hd]
        s = jnp.einsum("bqd,bkd->bqk", c(qh), c(kh),
                       preferred_element_type=jnp.float32) * scale
        s = s - jnp.max(s, axis=-1, keepdims=True)
        p = jnp.exp(s)
        p = p * pl.reciprocal(jnp.sum(p, axis=-1, keepdims=True), approx=True)
        head_outs.append(jnp.einsum("bqk,bkd->bqd", c(p), c(vh),
                                    preferred_element_type=jnp.float32))

    # Single fused out-projection on the concatenated heads.
    attn = jnp.concatenate(head_outs, axis=-1).reshape(M, D)
    attn = jnp.dot(c(attn), out_w_ref[0], preferred_element_type=jnp.float32)
    attn = attn + out_b_ref[0].astype(jnp.float32)

    h = _layernorm(h + attn, ln1_g_ref[0].astype(jnp.float32),
                   ln1_b_ref[0].astype(jnp.float32))

    # ---- Feed-forward (relu) ---------------------------------------------------
    ff = jnp.dot(c(h), lin1_w_ref[0], preferred_element_type=jnp.float32)
    ff = jnp.maximum(ff + lin1_b_ref[0].astype(jnp.float32), 0.0)
    ff = jnp.dot(c(ff), lin2_w_ref[0], preferred_element_type=jnp.float32)
    ff = ff + lin2_b_ref[0].astype(jnp.float32)

    h = _layernorm(h + ff, ln2_g_ref[0].astype(jnp.float32),
                   ln2_b_ref[0].astype(jnp.float32))
    h_ref[...] = h

    # ---- project_out (Conv1d, kernel_size=1), last layer step only ------------
    @pl.when(layer == pl.num_programs(1) - 1)
    def _():
        y = jnp.dot(c(h), w_out_ref[...], preferred_element_type=jnp.float32)
        y = y + b_out_ref[...].astype(jnp.float32)
        o_ref[...] = y.reshape(BT, L, C_in).astype(o_ref.dtype)


def transformer_encoder_forward(x, params, *, nhead, num_layers,
                                batch_tile=None, compute_dtype=jnp.bfloat16):
    B, C_in, L = x.shape
    D = params["w_in"].shape[1]
    FF = params["lin1_w"].shape[2]
    D3 = 3 * D

    BT = batch_tile if batch_tile is not None else min(B, 8)
    assert B % BT == 0, "batch must be divisible by the batch tile"

    # Layout plumbing done host-side (free): x -> (B, L, C_in); weights are
    # already stored pre-transposed so the kernel never does `w.T`.
    x_t = jnp.transpose(x, (0, 2, 1))

    cd = compute_dtype
    args = [
        params["w_in"].astype(cd), params["b_in"],
        params["qkv_w"].astype(cd), params["qkv_b"],
        params["out_w"].astype(cd), params["out_b"],
        params["ln1_g"], params["ln1_b"],
        params["lin1_w"].astype(cd), params["lin1_b"],
        params["lin2_w"].astype(cd), params["lin2_b"],
        params["ln2_g"], params["ln2_b"],
        params["w_out"].astype(cd), params["b_out"],
    ]

    in_specs = [
        pl.BlockSpec((BT, L, C_in), lambda b, l: (b, 0, 0)),   # x (batch tiled)
        pl.BlockSpec((C_in, D), lambda b, l: (0, 0)),          # w_in
        pl.BlockSpec((1, D), lambda b, l: (0, 0)),             # b_in
        pl.BlockSpec((1, D, D3), lambda b, l: (l, 0, 0)),      # qkv_w (streamed)
        pl.BlockSpec((1, 1, D3), lambda b, l: (l, 0, 0)),      # qkv_b
        pl.BlockSpec((1, D, D), lambda b, l: (l, 0, 0)),       # out_w
        pl.BlockSpec((1, 1, D), lambda b, l: (l, 0, 0)),       # out_b
        pl.BlockSpec((1, 1, D), lambda b, l: (l, 0, 0)),       # ln1_g
        pl.BlockSpec((1, 1, D), lambda b, l: (l, 0, 0)),       # ln1_b
        pl.BlockSpec((1, D, FF), lambda b, l: (l, 0, 0)),      # lin1_w
        pl.BlockSpec((1, 1, FF), lambda b, l: (l, 0, 0)),      # lin1_b
        pl.BlockSpec((1, FF, D), lambda b, l: (l, 0, 0)),      # lin2_w
        pl.BlockSpec((1, 1, D), lambda b, l: (l, 0, 0)),       # lin2_b
        pl.BlockSpec((1, 1, D), lambda b, l: (l, 0, 0)),       # ln2_g
        pl.BlockSpec((1, 1, D), lambda b, l: (l, 0, 0)),       # ln2_b
        pl.BlockSpec((D, C_in), lambda b, l: (0, 0)),          # w_out
        pl.BlockSpec((1, C_in), lambda b, l: (0, 0)),          # b_out
    ]

    kernel = functools.partial(encoder_kernel, nhead=nhead,
                               compute_dtype=compute_dtype)

    y = pl.pallas_call(
        kernel,
        out_shape=jax.ShapeDtypeStruct((B, L, C_in), x.dtype),
        grid_spec=pltpu.PrefetchScalarGridSpec(
            num_scalar_prefetch=0,
            grid=(B // BT, num_layers),          # layer axis innermost
            in_specs=in_specs,
            out_specs=pl.BlockSpec((BT, L, C_in), lambda b, l: (b, 0, 0)),
            scratch_shapes=[pltpu.VMEM((BT * L, D), jnp.float32)],
        ),
        compiler_params=pltpu.CompilerParams(
            dimension_semantics=("parallel", "arbitrary"),
            # Size from one layer's (double-buffered) weights + activations;
            # well above the 16/32 MiB scoped defaults.
            vmem_limit_bytes=64 * 1024 * 1024,
        ),
    )(x_t, *args)

    return jnp.transpose(y, (0, 2, 1))          # back to PyTorch NCL layout


# --------------------------- pure-JAX reference ------------------------------
def reference_forward(x, params, *, nhead, num_layers):
    D = params["w_in"].shape[1]
    hd = D // nhead
    h = jnp.einsum("bcl,cd->bld", x, params["w_in"]) + params["b_in"][0]
    for layer in range(num_layers):
        qkv = h @ params["qkv_w"][layer] + params["qkv_b"][layer, 0]
        q, k, v = qkv[..., :D], qkv[..., D:2 * D], qkv[..., 2 * D:]
        heads = []
        for hh in range(nhead):
            sl = slice(hh * hd, (hh + 1) * hd)
            s = jnp.einsum("bqd,bkd->bqk", q[..., sl], k[..., sl]) / math.sqrt(hd)
            p = jax.nn.softmax(s, axis=-1)
            heads.append(jnp.einsum("bqk,bkd->bqd", p, v[..., sl]))
        attn = jnp.concatenate(heads, axis=-1) @ params["out_w"][layer]
        attn = attn + params["out_b"][layer, 0]
        h = _layernorm(h + attn, params["ln1_g"][layer, 0], params["ln1_b"][layer, 0])
        ff = jax.nn.relu(h @ params["lin1_w"][layer] + params["lin1_b"][layer, 0])
        ff = ff @ params["lin2_w"][layer] + params["lin2_b"][layer, 0]
        h = _layernorm(h + ff, params["ln2_g"][layer, 0], params["ln2_b"][layer, 0])
    y = h @ params["w_out"] + params["b_out"][0]
    return jnp.transpose(y, (0, 2, 1))


def init_params(key, *, c_in, d_model, nhead, dim_ff, num_layers):
    keys = jax.random.split(key, 16)
    s = 0.02

    def n(k, shape):
        return jax.random.normal(k, shape, jnp.float32) * s

    # All matrices stored pre-transposed for `x @ W` in-kernel usage.
    return {
        "w_in":  n(keys[0], (c_in, d_model)),
        "b_in":  n(keys[1], (1, d_model)),
        "qkv_w": n(keys[2], (num_layers, d_model, 3 * d_model)),
        "qkv_b": n(keys[3], (num_layers, 1, 3 * d_model)),
        "out_w": n(keys[4], (num_layers, d_model, d_model)),
        "out_b": n(keys[5], (num_layers, 1, d_model)),
        "ln1_g": jnp.ones((num_layers, 1, d_model), jnp.float32),
        "ln1_b": jnp.zeros((num_layers, 1, d_model), jnp.float32),
        "lin1_w": n(keys[6], (num_layers, d_model, dim_ff)),
        "lin1_b": n(keys[7], (num_layers, 1, dim_ff)),
        "lin2_w": n(keys[8], (num_layers, dim_ff, d_model)),
        "lin2_b": n(keys[9], (num_layers, 1, d_model)),
        "ln2_g": jnp.ones((num_layers, 1, d_model), jnp.float32),
        "ln2_b": jnp.zeros((num_layers, 1, d_model), jnp.float32),
        "w_out": n(keys[10], (d_model, c_in)),
        "b_out": n(keys[11], (1, c_in)),
    }


if __name__ == "__main__":
    # Small shapes consistent with the module:
    #   in_channels=4, L=16, d_model=32, nhead=4, dim_feedforward=64,
    #   num_layers=2, dropout=0.0, batch_first=True.
    B, C_IN, L = 2, 4, 16
    D_MODEL, NHEAD, DIM_FF, NUM_LAYERS = 32, 4, 64, 2

    key = jax.random.PRNGKey(0)
    kx, kp = jax.random.split(key)
    x = jax.random.normal(kx, (B, C_IN, L), jnp.float32)
    params = init_params(kp, c_in=C_IN, d_model=D_MODEL, nhead=NHEAD,
                         dim_ff=DIM_FF, num_layers=NUM_LAYERS)

    out = transformer_encoder_forward(x, params, nhead=NHEAD,
                                      num_layers=NUM_LAYERS)
    out = jax.block_until_ready(out)

    ref = reference_forward(x, params, nhead=NHEAD, num_layers=NUM_LAYERS)
    assert out.shape == (B, C_IN, L), out.shape
    err = float(jnp.max(jnp.abs(out - ref)))
    assert jnp.allclose(out, ref, rtol=1e-2, atol=1e-2), err

    print("KERNEL_OK")
</pallas_src>

<mosaic_0001>
module attributes {stable_mosaic.version = 11 : i64} {
  func.func @encoder_kernel(%arg0: i32, %arg1: i32, %arg2: memref<2x16x4xf32, #tpu.memory_space<vmem>>, %arg3: memref<4x32xbf16, #tpu.memory_space<vmem>>, %arg4: memref<1x32xf32, #tpu.memory_space<vmem>>, %arg5: memref<1x32x96xbf16, #tpu.memory_space<vmem>>, %arg6: memref<1x1x96xf32, #tpu.memory_space<vmem>>, %arg7: memref<1x32x32xbf16, #tpu.memory_space<vmem>>, %arg8: memref<1x1x32xf32, #tpu.memory_space<vmem>>, %arg9: memref<1x1x32xf32, #tpu.memory_space<vmem>>, %arg10: memref<1x1x32xf32, #tpu.memory_space<vmem>>, %arg11: memref<1x32x64xbf16, #tpu.memory_space<vmem>>, %arg12: memref<1x1x64xf32, #tpu.memory_space<vmem>>, %arg13: memref<1x64x32xbf16, #tpu.memory_space<vmem>>, %arg14: memref<1x1x32xf32, #tpu.memory_space<vmem>>, %arg15: memref<1x1x32xf32, #tpu.memory_space<vmem>>, %arg16: memref<1x1x32xf32, #tpu.memory_space<vmem>>, %arg17: memref<32x4xbf16, #tpu.memory_space<vmem>>, %arg18: memref<1x4xf32, #tpu.memory_space<vmem>>, %arg19: memref<2x16x4xf32, #tpu.memory_space<vmem>>, %arg20: memref<32x32xf32, #tpu.memory_space<vmem>>) attributes {dimension_semantics = [#tpu.dimension_semantics<parallel>, #tpu.dimension_semantics<arbitrary>], iteration_bounds = array<i64: 1, 2>, scalar_prefetch = 0 : i64, scratch_operands = 1 : i64, tpu.core_type = #tpu.core_type<tc>, window_params = [{transform_indices = @transform_0, window_bounds = array<i64: 2, 16, 4>}, {pipeline_mode = #tpu.pipeline_mode<synchronous>, transform_indices = @transform_1, window_bounds = array<i64: 4, 32>}, {pipeline_mode = #tpu.pipeline_mode<synchronous>, transform_indices = @transform_2, window_bounds = array<i64: 1, 32>}, {transform_indices = @transform_3, window_bounds = array<i64: 1, 32, 96>}, {transform_indices = @transform_4, window_bounds = array<i64: 1, 1, 96>}, {transform_indices = @transform_5, window_bounds = array<i64: 1, 32, 32>}, {transform_indices = @transform_6, window_bounds = array<i64: 1, 1, 32>}, {transform_indices = @transform_7, window_bounds = array<i64: 1, 1, 32>}, {transform_indices = @transform_8, window_bounds = array<i64: 1, 1, 32>}, {transform_indices = @transform_9, window_bounds = array<i64: 1, 32, 64>}, {transform_indices = @transform_10, window_bounds = array<i64: 1, 1, 64>}, {transform_indices = @transform_11, window_bounds = array<i64: 1, 64, 32>}, {transform_indices = @transform_12, window_bounds = array<i64: 1, 1, 32>}, {transform_indices = @transform_13, window_bounds = array<i64: 1, 1, 32>}, {transform_indices = @transform_14, window_bounds = array<i64: 1, 1, 32>}, {pipeline_mode = #tpu.pipeline_mode<synchronous>, transform_indices = @transform_15, window_bounds = array<i64: 32, 4>}, {pipeline_mode = #tpu.pipeline_mode<synchronous>, transform_indices = @transform_16, window_bounds = array<i64: 1, 4>}, {transform_indices = @transform_17, window_bounds = array<i64: 2, 16, 4>}]} {
    %c0_i32 = arith.constant 0 : i32
    %0 = arith.cmpi eq, %arg1, %c0_i32 : i32
    %1 = arith.extui %0 : i1 to i32
    %c0_i32_0 = arith.constant 0 : i32
    %2 = arith.cmpi ne, %1, %c0_i32_0 : i32
    scf.if %2 {
      %c0_75 = arith.constant 0 : index
      %c0_76 = arith.constant 0 : index
      %c0_77 = arith.constant 0 : index
      %183 = vector.load %arg2[%c0_75, %c0_76, %c0_77] : memref<2x16x4xf32, #tpu.memory_space<vmem>>, vector<2x16x4xf32>
      %184 = vector.shape_cast %183 : vector<2x16x4xf32> to vector<32x4xf32>
      %185 = arith.truncf %184 : vector<32x4xf32> to vector<32x4xbf16>
      %c0_78 = arith.constant 0 : index
      %c0_79 = arith.constant 0 : index
      %186 = vector.load %arg3[%c0_78, %c0_79] : memref<4x32xbf16, #tpu.memory_space<vmem>>, vector<4x32xbf16>
      %cst_80 = arith.constant dense<0.000000e+00> : vector<32x32xf32>
      %187 = tpu.matmul %185, %186, %cst_80 {dimension_numbers = #tpu.dot_dimension_numbers<[1], [0], [0], [1], [0, 0, 1, 1], [], []>} : vector<32x4xbf16>, vector<4x32xbf16>, vector<32x32xf32> -> vector<32x32xf32>
      %c0_81 = arith.constant 0 : index
      %c0_82 = arith.constant 0 : index
      %188 = vector.load %arg4[%c0_81, %c0_82] : memref<1x32xf32, #tpu.memory_space<vmem>>, vector<1x32xf32>
      %189 = vector.broadcast %188 : vector<1x32xf32> to vector<32x32xf32>
      %190 = arith.addf %187, %189 : vector<32x32xf32>
      %c0_83 = arith.constant 0 : index
      %c0_84 = arith.constant 0 : index
      %191 = vector.load %arg20[%c0_83, %c0_84] : memref<32x32xf32, #tpu.memory_space<vmem>>, vector<32x32xf32>
      tpu.vector_store %arg20[%c0_83, %c0_84], %190 {strides = array<i32>} : memref<32x32xf32, #tpu.memory_space<vmem>>, vector<32x32xf32>,
    } else {
    }
    %c0 = arith.constant 0 : index
    %c0_1 = arith.constant 0 : index
    %3 = vector.load %arg20[%c0, %c0_1] : memref<32x32xf32, #tpu.memory_space<vmem>>, vector<32x32xf32>
    %4 = arith.truncf %3 : vector<32x32xf32> to vector<32x32xbf16>
    %c0_2 = arith.constant 0 : index
    %c0_3 = arith.constant 0 : index
    %c0_4 = arith.constant 0 : index
    %5 = vector.load %arg5[%c0_2, %c0_3, %c0_4] : memref<1x32x96xbf16, #tpu.memory_space<vmem>>, vector<1x32x96xbf16>
    %6 = vector.shape_cast %5 : vector<1x32x96xbf16> to vector<32x96xbf16>
    %cst = arith.constant dense<0.000000e+00> : vector<32x96xf32>
    %7 = tpu.matmul %4, %6, %cst {dimension_numbers = #tpu.dot_dimension_numbers<[1], [0], [0], [1], [0, 0, 1, 1], [], []>} : vector<32x32xbf16>, vector<32x96xbf16>, vector<32x96xf32> -> vector<32x96xf32>
    %c0_5 = arith.constant 0 : index
    %c0_6 = arith.constant 0 : index
    %c0_7 = arith.constant 0 : index
    %8 = vector.load %arg6[%c0_5, %c0_6, %c0_7] : memref<1x1x96xf32, #tpu.memory_space<vmem>>, vector<1x1x96xf32>
    %9 = vector.shape_cast %8 : vector<1x1x96xf32> to vector<1x96xf32>
    %10 = vector.broadcast %9 : vector<1x96xf32> to vector<32x96xf32>
    %11 = arith.addf %7, %10 : vector<32x96xf32>
    %12 = vector.shape_cast %11 : vector<32x96xf32> to vector<2x16x96xf32>
    %13 = vector.extract_strided_slice %12 {offsets = [0, 0, 0], sizes = [2, 16, 8], strides = [1, 1, 1]} : vector<2x16x96xf32> to vector<2x16x8xf32>
    %14 = vector.extract_strided_slice %12 {offsets = [0, 0, 32], sizes = [2, 16, 8], strides = [1, 1, 1]} : vector<2x16x96xf32> to vector<2x16x8xf32>
    %15 = vector.extract_strided_slice %12 {offsets = [0, 0, 64], sizes = [2, 16, 8], strides = [1, 1, 1]} : vector<2x16x96xf32> to vector<2x16x8xf32>
    %16 = arith.truncf %13 : vector<2x16x8xf32> to vector<2x16x8xbf16>
    %17 = arith.truncf %14 : vector<2x16x8xf32> to vector<2x16x8xbf16>
    "tpu.trace_start"() <{level = 10 : i32, message = "bqd,bkd->bqk"}> : () -> ()
    %cst_8 = arith.constant dense<0.000000e+00> : vector<2x16x16xf32>
    %18 = tpu.matmul %16, %17, %cst_8 {dimension_numbers = #tpu.dot_dimension_numbers<[2], [2], [1], [1], [0, 0, 0, 1, 1, 1], [0], [0]>} : vector<2x16x8xbf16>, vector<2x16x8xbf16>, vector<2x16x16xf32> -> vector<2x16x16xf32>
    "tpu.trace_stop"() : () -> ()
    %cst_9 = arith.constant 0.353553385 : f32
    %19 = vector.broadcast %cst_9 : f32 to vector<2x16x16xf32>
    %20 = arith.mulf %18, %19 : vector<2x16x16xf32>
    %cst_10 = arith.constant dense<0xFF800000> : vector<2x16xf32>
    %21 = vector.multi_reduction <maximumf>, %20, %cst_10 [2] : vector<2x16x16xf32> to vector<2x16xf32>
    %22 = vector.shape_cast %21 : vector<2x16xf32> to vector<2x16x1xf32>
    %23 = vector.broadcast %22 : vector<2x16x1xf32> to vector<2x16x16xf32>
    %24 = arith.subf %20, %23 : vector<2x16x16xf32>
    %25 = math.exp %24 : vector<2x16x16xf32>
    %cst_11 = arith.constant dense<0.000000e+00> : vector<2x16xf32>
    %26 = vector.multi_reduction <add>, %25, %cst_11 [2] : vector<2x16x16xf32> to vector<2x16xf32>
    %27 = vector.shape_cast %26 : vector<2x16xf32> to vector<2x16x1xf32>
    %28 = tpu.reciprocal %27 {approx = true} : vector<2x16x1xf32> -> vector<2x16x1xf32>
    %29 = vector.broadcast %28 : vector<2x16x1xf32> to vector<2x16x16xf32>
    %30 = arith.mulf %25, %29 : vector<2x16x16xf32>
    %31 = arith.truncf %30 : vector<2x16x16xf32> to vector<2x16x16xbf16>
    %32 = arith.truncf %15 : vector<2x16x8xf32> to vector<2x16x8xbf16>
    "tpu.trace_start"() <{level = 10 : i32, message = "bqk,bkd->bqd"}> : () -> ()
    %cst_12 = arith.constant dense<0.000000e+00> : vector<2x16x8xf32>
    %33 = tpu.matmul %31, %32, %cst_12 {dimension_numbers = #tpu.dot_dimension_numbers<[2], [1], [1], [2], [0, 0, 0, 1, 1, 2], [0], [0]>} : vector<2x16x16xbf16>, vector<2x16x8xbf16>, vector<2x16x8xf32> -> vector<2x16x8xf32>
    "tpu.trace_stop"() : () -> ()
    %34 = vector.extract_strided_slice %12 {offsets = [0, 0, 8], sizes = [2, 16, 8], strides = [1, 1, 1]} : vector<2x16x96xf32> to vector<2x16x8xf32>
    %35 = vector.extract_strided_slice %12 {offsets = [0, 0, 40], sizes = [2, 16, 8], strides = [1, 1, 1]} : vector<2x16x96xf32> to vector<2x16x8xf32>
    %36 = vector.extract_strided_slice %12 {offsets = [0, 0, 72], sizes = [2, 16, 8], strides = [1, 1, 1]} : vector<2x16x96xf32> to vector<2x16x8xf32>
    %37 = arith.truncf %34 : vector<2x16x8xf32> to vector<2x16x8xbf16>
    %38 = arith.truncf %35 : vector<2x16x8xf32> to vector<2x16x8xbf16>
    "tpu.trace_start"() <{level = 10 : i32, message = "bqd,bkd->bqk"}> : () -> ()
    %cst_13 = arith.constant dense<0.000000e+00> : vector<2x16x16xf32>
    %39 = tpu.matmul %37, %38, %cst_13 {dimension_numbers = #tpu.dot_dimension_numbers<[2], [2], [1], [1], [0, 0, 0, 1, 1, 1], [0], [0]>} : vector<2x16x8xbf16>, vector<2x16x8xbf16>, vector<2x16x16xf32> -> vector<2x16x16xf32>
    "tpu.trace_stop"() : () -> ()
    %cst_14 = arith.constant 0.353553385 : f32
    %40 = vector.broadcast %cst_14 : f32 to vector<2x16x16xf32>
    %41 = arith.mulf %39, %40 : vector<2x16x16xf32>
    %cst_15 = arith.constant dense<0xFF800000> : vector<2x16xf32>
    %42 = vector.multi_reduction <maximumf>, %41, %cst_15 [2] : vector<2x16x16xf32> to vector<2x16xf32>
    %43 = vector.shape_cast %42 : vector<2x16xf32> to vector<2x16x1xf32>
    %44 = vector.broadcast %43 : vector<2x16x1xf32> to vector<2x16x16xf32>
    %45 = arith.subf %41, %44 : vector<2x16x16xf32>
    %46 = math.exp %45 : vector<2x16x16xf32>
    %cst_16 = arith.constant dense<0.000000e+00> : vector<2x16xf32>
    %47 = vector.multi_reduction <add>, %46, %cst_16 [2] : vector<2x16x16xf32> to vector<2x16xf32>
    %48 = vector.shape_cast %47 : vector<2x16xf32> to vector<2x16x1xf32>
    %49 = tpu.reciprocal %48 {approx = true} : vector<2x16x1xf32> -> vector<2x16x1xf32>
    %50 = vector.broadcast %49 : vector<2x16x1xf32> to vector<2x16x16xf32>
    %51 = arith.mulf %46, %50 : vector<2x16x16xf32>
    %52 = arith.truncf %51 : vector<2x16x16xf32> to vector<2x16x16xbf16>
    %53 = arith.truncf %36 : vector<2x16x8xf32> to vector<2x16x8xbf16>
    "tpu.trace_start"() <{level = 10 : i32, message = "bqk,bkd->bqd"}> : () -> ()
    %cst_17 = arith.constant dense<0.000000e+00> : vector<2x16x8xf32>
    %54 = tpu.matmul %52, %53, %cst_17 {dimension_numbers = #tpu.dot_dimension_numbers<[2], [1], [1], [2], [0, 0, 0, 1, 1, 2], [0], [0]>} : vector<2x16x16xbf16>, vector<2x16x8xbf16>, vector<2x16x8xf32> -> vector<2x16x8xf32>
    "tpu.trace_stop"() : () -> ()
    %55 = vector.extract_strided_slice %12 {offsets = [0, 0, 16], sizes = [2, 16, 8], strides = [1, 1, 1]} : vector<2x16x96xf32> to vector<2x16x8xf32>
    %56 = vector.extract_strided_slice %12 {offsets = [0, 0, 48], sizes = [2, 16, 8], strides = [1, 1, 1]} : vector<2x16x96xf32> to vector<2x16x8xf32>
    %57 = vector.extract_strided_slice %12 {offsets = [0, 0, 80], sizes = [2, 16, 8], strides = [1, 1, 1]} : vector<2x16x96xf32> to vector<2x16x8xf32>
    %58 = arith.truncf %55 : vector<2x16x8xf32> to vector<2x16x8xbf16>
    %59 = arith.truncf %56 : vector<2x16x8xf32> to vector<2x16x8xbf16>
    "tpu.trace_start"() <{level = 10 : i32, message = "bqd,bkd->bqk"}> : () -> ()
    %cst_18 = arith.constant dense<0.000000e+00> : vector<2x16x16xf32>
    %60 = tpu.matmul %58, %59, %cst_18 {dimension_numbers = #tpu.dot_dimension_numbers<[2], [2], [1], [1], [0, 0, 0, 1, 1, 1], [0], [0]>} : vector<2x16x8xbf16>, vector<2x16x8xbf16>, vector<2x16x16xf32> -> vector<2x16x16xf32>
    "tpu.trace_stop"() : () -> ()
    %cst_19 = arith.constant 0.353553385 : f32
    %61 = vector.broadcast %cst_19 : f32 to vector<2x16x16xf32>
    %62 = arith.mulf %60, %61 : vector<2x16x16xf32>
    %cst_20 = arith.constant dense<0xFF800000> : vector<2x16xf32>
    %63 = vector.multi_reduction <maximumf>, %62, %cst_20 [2] : vector<2x16x16xf32> to vector<2x16xf32>
    %64 = vector.shape_cast %63 : vector<2x16xf32> to vector<2x16x1xf32>
    %65 = vector.broadcast %64 : vector<2x16x1xf32> to vector<2x16x16xf32>
    %66 = arith.subf %62, %65 : vector<2x16x16xf32>
    %67 = math.exp %66 : vector<2x16x16xf32>
    %cst_21 = arith.constant dense<0.000000e+00> : vector<2x16xf32>
    %68 = vector.multi_reduction <add>, %67, %cst_21 [2] : vector<2x16x16xf32> to vector<2x16xf32>
    %69 = vector.shape_cast %68 : vector<2x16xf32> to vector<2x16x1xf32>
    %70 = tpu.reciprocal %69 {approx = true} : vector<2x16x1xf32> -> vector<2x16x1xf32>
    %71 = vector.broadcast %70 : vector<2x16x1xf32> to vector<2x16x16xf32>
    %72 = arith.mulf %67, %71 : vector<2x16x16xf32>
    %73 = arith.truncf %72 : vector<2x16x16xf32> to vector<2x16x16xbf16>
    %74 = arith.truncf %57 : vector<2x16x8xf32> to vector<2x16x8xbf16>
    "tpu.trace_start"() <{level = 10 : i32, message = "bqk,bkd->bqd"}> : () -> ()
    %cst_22 = arith.constant dense<0.000000e+00> : vector<2x16x8xf32>
    %75 = tpu.matmul %73, %74, %cst_22 {dimension_numbers = #tpu.dot_dimension_numbers<[2], [1], [1], [2], [0, 0, 0, 1, 1, 2], [0], [0]>} : vector<2x16x16xbf16>, vector<2x16x8xbf16>, vector<2x16x8xf32> -> vector<2x16x8xf32>
    "tpu.trace_stop"() : () -> ()
    %76 = vector.extract_strided_slice %12 {offsets = [0, 0, 24], sizes = [2, 16, 8], strides = [1, 1, 1]} : vector<2x16x96xf32> to vector<2x16x8xf32>
    %77 = vector.extract_strided_slice %12 {offsets = [0, 0, 56], sizes = [2, 16, 8], strides = [1, 1, 1]} : vector<2x16x96xf32> to vector<2x16x8xf32>
    %78 = vector.extract_strided_slice %12 {offsets = [0, 0, 88], sizes = [2, 16, 8], strides = [1, 1, 1]} : vector<2x16x96xf32> to vector<2x16x8xf32>
    %79 = arith.truncf %76 : vector<2x16x8xf32> to vector<2x16x8xbf16>
    %80 = arith.truncf %77 : vector<2x16x8xf32> to vector<2x16x8xbf16>
    "tpu.trace_start"() <{level = 10 : i32, message = "bqd,bkd->bqk"}> : () -> ()
    %cst_23 = arith.constant dense<0.000000e+00> : vector<2x16x16xf32>
    %81 = tpu.matmul %79, %80, %cst_23 {dimension_numbers = #tpu.dot_dimension_numbers<[2], [2], [1], [1], [0, 0, 0, 1, 1, 1], [0], [0]>} : vector<2x16x8xbf16>, vector<2x16x8xbf16>, vector<2x16x16xf32> -> vector<2x16x16xf32>
    "tpu.trace_stop"() : () -> ()
    %cst_24 = arith.constant 0.353553385 : f32
    %82 = vector.broadcast %cst_24 : f32 to vector<2x16x16xf32>
    %83 = arith.mulf %81, %82 : vector<2x16x16xf32>
    %cst_25 = arith.constant dense<0xFF800000> : vector<2x16xf32>
    %84 = vector.multi_reduction <maximumf>, %83, %cst_25 [2] : vector<2x16x16xf32> to vector<2x16xf32>
    %85 = vector.shape_cast %84 : vector<2x16xf32> to vector<2x16x1xf32>
    %86 = vector.broadcast %85 : vector<2x16x1xf32> to vector<2x16x16xf32>
    %87 = arith.subf %83, %86 : vector<2x16x16xf32>
    %88 = math.exp %87 : vector<2x16x16xf32>
    %cst_26 = arith.constant dense<0.000000e+00> : vector<2x16xf32>
    %89 = vector.multi_reduction <add>, %88, %cst_26 [2] : vector<2x16x16xf32> to vector<2x16xf32>
    %90 = vector.shape_cast %89 : vector<2x16xf32> to vector<2x16x1xf32>
    %91 = tpu.reciprocal %90 {approx = true} : vector<2x16x1xf32> -> vector<2x16x1xf32>
    %92 = vector.broadcast %91 : vector<2x16x1xf32> to vector<2x16x16xf32>
    %93 = arith.mulf %88, %92 : vector<2x16x16xf32>
    %94 = arith.truncf %93 : vector<2x16x16xf32> to vector<2x16x16xbf16>
    %95 = arith.truncf %78 : vector<2x16x8xf32> to vector<2x16x8xbf16>
    "tpu.trace_start"() <{level = 10 : i32, message = "bqk,bkd->bqd"}> : () -> ()
    %cst_27 = arith.constant dense<0.000000e+00> : vector<2x16x8xf32>
    %96 = tpu.matmul %94, %95, %cst_27 {dimension_numbers = #tpu.dot_dimension_numbers<[2], [1], [1], [2], [0, 0, 0, 1, 1, 2], [0], [0]>} : vector<2x16x16xbf16>, vector<2x16x8xbf16>, vector<2x16x8xf32> -> vector<2x16x8xf32>
    "tpu.trace_stop"() : () -> ()
    %97 = tpu.concatenate %33, %54, %75, %96 in 2 : vector<2x16x8xf32>, vector<2x16x8xf32>, vector<2x16x8xf32>, vector<2x16x8xf32> -> vector<2x16x32xf32>
    %98 = vector.shape_cast %97 : vector<2x16x32xf32> to vector<32x32xf32>
    %99 = arith.truncf %98 : vector<32x32xf32> to vector<32x32xbf16>
    %c0_28 = arith.constant 0 : index
    %c0_29 = arith.constant 0 : index
    %c0_30 = arith.constant 0 : index
    %100 = vector.load %arg7[%c0_28, %c0_29, %c0_30] : memref<1x32x32xbf16, #tpu.memory_space<vmem>>, vector<1x32x32xbf16>
    %101 = vector.shape_cast %100 : vector<1x32x32xbf16> to vector<32x32xbf16>
    %cst_31 = arith.constant dense<0.000000e+00> : vector<32x32xf32>
    %102 = tpu.matmul %99, %101, %cst_31 {dimension_numbers = #tpu.dot_dimension_numbers<[1], [0], [0], [1], [0, 0, 1, 1], [], []>} : vector<32x32xbf16>, vector<32x32xbf16>, vector<32x32xf32> -> vector<32x32xf32>
    %c0_32 = arith.constant 0 : index
    %c0_33 = arith.constant 0 : index
    %c0_34 = arith.constant 0 : index
    %103 = vector.load %arg8[%c0_32, %c0_33, %c0_34] : memref<1x1x32xf32, #tpu.memory_space<vmem>>, vector<1x1x32xf32>
    %104 = vector.shape_cast %103 : vector<1x1x32xf32> to vector<1x32xf32>
    %105 = vector.broadcast %104 : vector<1x32xf32> to vector<32x32xf32>
    %106 = arith.addf %102, %105 : vector<32x32xf32>
    %107 = arith.addf %3, %106 : vector<32x32xf32>
    %c0_35 = arith.constant 0 : index
    %c0_36 = arith.constant 0 : index
    %c0_37 = arith.constant 0 : index
    %108 = vector.load %arg9[%c0_35, %c0_36, %c0_37] : memref<1x1x32xf32, #tpu.memory_space<vmem>>, vector<1x1x32xf32>
    %109 = vector.shape_cast %108 : vector<1x1x32xf32> to vector<1x32xf32>
    %c0_38 = arith.constant 0 : index
    %c0_39 = arith.constant 0 : index
    %c0_40 = arith.constant 0 : index
    %110 = vector.load %arg10[%c0_38, %c0_39, %c0_40] : memref<1x1x32xf32, #tpu.memory_space<vmem>>, vector<1x1x32xf32>
    %111 = vector.shape_cast %110 : vector<1x1x32xf32> to vector<1x32xf32>
    %cst_41 = arith.constant dense<0.000000e+00> : vector<32xf32>
    %112 = vector.multi_reduction <add>, %107, %cst_41 [1] : vector<32x32xf32> to vector<32xf32>
    %113 = vector.shape_cast %112 : vector<32xf32> to vector<32x1xf32>
    %cst_42 = arith.constant 3.200000e+01 : f32
    %114 = vector.broadcast %cst_42 : f32 to vector<32x1xf32>
    %115 = arith.divf %113, %114 : vector<32x1xf32>
    %116 = vector.broadcast %115 : vector<32x1xf32> to vector<32x32xf32>
    %117 = arith.subf %107, %116 : vector<32x32xf32>
    %118 = arith.mulf %117, %117 : vector<32x32xf32>
    %cst_43 = arith.constant dense<0.000000e+00> : vector<32xf32>
    %119 = vector.multi_reduction <add>, %118, %cst_43 [1] : vector<32x32xf32> to vector<32xf32>
    %120 = vector.shape_cast %119 : vector<32xf32> to vector<32x1xf32>
    %cst_44 = arith.constant 3.200000e+01 : f32
    %121 = vector.broadcast %cst_44 : f32 to vector<32x1xf32>
    %122 = arith.divf %120, %121 : vector<32x1xf32>
    %123 = vector.broadcast %115 : vector<32x1xf32> to vector<32x32xf32>
    %124 = arith.subf %107, %123 : vector<32x32xf32>
    %cst_45 = arith.constant 9.99999974E-6 : f32
    %125 = vector.broadcast %cst_45 : f32 to vector<32x1xf32>
    %126 = arith.addf %122, %125 : vector<32x1xf32>
    %127 = math.rsqrt %126 : vector<32x1xf32>
    %128 = vector.broadcast %127 : vector<32x1xf32> to vector<32x32xf32>
    %129 = arith.mulf %124, %128 : vector<32x32xf32>
    %130 = vector.broadcast %109 : vector<1x32xf32> to vector<32x32xf32>
    %131 = arith.mulf %129, %130 : vector<32x32xf32>
    %132 = vector.broadcast %111 : vector<1x32xf32> to vector<32x32xf32>
    %133 = arith.addf %131, %132 : vector<32x32xf32>
    %134 = arith.truncf %133 : vector<32x32xf32> to vector<32x32xbf16>
    %c0_46 = arith.constant 0 : index
    %c0_47 = arith.constant 0 : index
    %c0_48 = arith.constant 0 : index
    %135 = vector.load %arg11[%c0_46, %c0_47, %c0_48] : memref<1x32x64xbf16, #tpu.memory_space<vmem>>, vector<1x32x64xbf16>
    %136 = vector.shape_cast %135 : vector<1x32x64xbf16> to vector<32x64xbf16>
    %cst_49 = arith.constant dense<0.000000e+00> : vector<32x64xf32>
    %137 = tpu.matmul %134, %136, %cst_49 {dimension_numbers = #tpu.dot_dimension_numbers<[1], [0], [0], [1], [0, 0, 1, 1], [], []>} : vector<32x32xbf16>, vector<32x64xbf16>, vector<32x64xf32> -> vector<32x64xf32>
    %c0_50 = arith.constant 0 : index
    %c0_51 = arith.constant 0 : index
    %c0_52 = arith.constant 0 : index
    %138 = vector.load %arg12[%c0_50, %c0_51, %c0_52] : memref<1x1x64xf32, #tpu.memory_space<vmem>>, vector<1x1x64xf32>
    %139 = vector.shape_cast %138 : vector<1x1x64xf32> to vector<1x64xf32>
    %140 = vector.broadcast %139 : vector<1x64xf32> to vector<32x64xf32>
    %141 = arith.addf %137, %140 : vector<32x64xf32>
    %cst_53 = arith.constant 0.000000e+00 : f32
    %142 = vector.broadcast %cst_53 : f32 to vector<32x64xf32>
    %143 = arith.maximumf %141, %142 : vector<32x64xf32>
    %144 = arith.truncf %143 : vector<32x64xf32> to vector<32x64xbf16>
    %c0_54 = arith.constant 0 : index
    %c0_55 = arith.constant 0 : index
    %c0_56 = arith.constant 0 : index
    %145 = vector.load %arg13[%c0_54, %c0_55, %c0_56] : memref<1x64x32xbf16, #tpu.memory_space<vmem>>, vector<1x64x32xbf16>
    %146 = vector.shape_cast %145 : vector<1x64x32xbf16> to vector<64x32xbf16>
    %cst_57 = arith.constant dense<0.000000e+00> : vector<32x32xf32>
    %147 = tpu.matmul %144, %146, %cst_57 {dimension_numbers = #tpu.dot_dimension_numbers<[1], [0], [0], [1], [0, 0, 1, 1], [], []>} : vector<32x64xbf16>, vector<64x32xbf16>, vector<32x32xf32> -> vector<32x32xf32>
    %c0_58 = arith.constant 0 : index
    %c0_59 = arith.constant 0 : index
    %c0_60 = arith.constant 0 : index
    %148 = vector.load %arg14[%c0_58, %c0_59, %c0_60] : memref<1x1x32xf32, #tpu.memory_space<vmem>>, vector<1x1x32xf32>
    %149 = vector.shape_cast %148 : vector<1x1x32xf32> to vector<1x32xf32>
    %150 = vector.broadcast %149 : vector<1x32xf32> to vector<32x32xf32>
    %151 = arith.addf %147, %150 : vector<32x32xf32>
    %152 = arith.addf %133, %151 : vector<32x32xf32>
    %c0_61 = arith.constant 0 : index
    %c0_62 = arith.constant 0 : index
    %c0_63 = arith.constant 0 : index
    %153 = vector.load %arg15[%c0_61, %c0_62, %c0_63] : memref<1x1x32xf32, #tpu.memory_space<vmem>>, vector<1x1x32xf32>
    %154 = vector.shape_cast %153 : vector<1x1x32xf32> to vector<1x32xf32>
    %c0_64 = arith.constant 0 : index
    %c0_65 = arith.constant 0 : index
    %c0_66 = arith.constant 0 : index
    %155 = vector.load %arg16[%c0_64, %c0_65, %c0_66] : memref<1x1x32xf32, #tpu.memory_space<vmem>>, vector<1x1x32xf32>
    %156 = vector.shape_cast %155 : vector<1x1x32xf32> to vector<1x32xf32>
    %cst_67 = arith.constant dense<0.000000e+00> : vector<32xf32>
    %157 = vector.multi_reduction <add>, %152, %cst_67 [1] : vector<32x32xf32> to vector<32xf32>
    %158 = vector.shape_cast %157 : vector<32xf32> to vector<32x1xf32>
    %cst_68 = arith.constant 3.200000e+01 : f32
    %159 = vector.broadcast %cst_68 : f32 to vector<32x1xf32>
    %160 = arith.divf %158, %159 : vector<32x1xf32>
    %161 = vector.broadcast %160 : vector<32x1xf32> to vector<32x32xf32>
    %162 = arith.subf %152, %161 : vector<32x32xf32>
    %163 = arith.mulf %162, %162 : vector<32x32xf32>
    %cst_69 = arith.constant dense<0.000000e+00> : vector<32xf32>
    %164 = vector.multi_reduction <add>, %163, %cst_69 [1] : vector<32x32xf32> to vector<32xf32>
    %165 = vector.shape_cast %164 : vector<32xf32> to vector<32x1xf32>
    %cst_70 = arith.constant 3.200000e+01 : f32
    %166 = vector.broadcast %cst_70 : f32 to vector<32x1xf32>
    %167 = arith.divf %165, %166 : vector<32x1xf32>
    %168 = vector.broadcast %160 : vector<32x1xf32> to vector<32x32xf32>
    %169 = arith.subf %152, %168 : vector<32x32xf32>
    %cst_71 = arith.constant 9.99999974E-6 : f32
    %170 = vector.broadcast %cst_71 : f32 to vector<32x1xf32>
    %171 = arith.addf %167, %170 : vector<32x1xf32>
    %172 = math.rsqrt %171 : vector<32x1xf32>
    %173 = vector.broadcast %172 : vector<32x1xf32> to vector<32x32xf32>
    %174 = arith.mulf %169, %173 : vector<32x32xf32>
    %175 = vector.broadcast %154 : vector<1x32xf32> to vector<32x32xf32>
    %176 = arith.mulf %174, %175 : vector<32x32xf32>
    %177 = vector.broadcast %156 : vector<1x32xf32> to vector<32x32xf32>
    %178 = arith.addf %176, %177 : vector<32x32xf32>
    %c0_72 = arith.constant 0 : index
    %c0_73 = arith.constant 0 : index
    %179 = vector.load %arg20[%c0_72, %c0_73] : memref<32x32xf32, #tpu.memory_space<vmem>>, vector<32x32xf32>
    tpu.vector_store %arg20[%c0_72, %c0_73], %178 {strides = array<i32>} : memref<32x32xf32, #tpu.memory_space<vmem>>, vector<32x32xf32>,
    %c1_i32 = arith.constant 1 : i32
    %180 = arith.cmpi eq, %arg1, %c1_i32 : i32
    %181 = arith.extui %180 : i1 to i32
    %c0_i32_74 = arith.constant 0 : i32
    %182 = arith.cmpi ne, %181, %c0_i32_74 : i32
    scf.if %182 {
      %183 = arith.truncf %178 : vector<32x32xf32> to vector<32x32xbf16>
      %c0_75 = arith.constant 0 : index
      %c0_76 = arith.constant 0 : index
      %184 = vector.load %arg17[%c0_75, %c0_76] : memref<32x4xbf16, #tpu.memory_space<vmem>>, vector<32x4xbf16>
      %cst_77 = arith.constant dense<0.000000e+00> : vector<32x4xf32>
      %185 = tpu.matmul %183, %184, %cst_77 {dimension_numbers = #tpu.dot_dimension_numbers<[1], [0], [0], [1], [0, 0, 1, 1], [], []>} : vector<32x32xbf16>, vector<32x4xbf16>, vector<32x4xf32> -> vector<32x4xf32>
      %c0_78 = arith.constant 0 : index
      %c0_79 = arith.constant 0 : index
      %186 = vector.load %arg18[%c0_78, %c0_79] : memref<1x4xf32, #tpu.memory_space<vmem>>, vector<1x4xf32>
      %187 = vector.broadcast %186 : vector<1x4xf32> to vector<32x4xf32>
      %188 = arith.addf %185, %187 : vector<32x4xf32>
      %189 = vector.shape_cast %188 : vector<32x4xf32> to vector<2x16x4xf32>
      %c0_80 = arith.constant 0 : index
      %c0_81 = arith.constant 0 : index
      %c0_82 = arith.constant 0 : index
      %190 = vector.load %arg19[%c0_80, %c0_81, %c0_82] : memref<2x16x4xf32, #tpu.memory_space<vmem>>, vector<2x16x4xf32>
      tpu.vector_store %arg19[%c0_80, %c0_81, %c0_82], %189 {strides = array<i32>} : memref<2x16x4xf32, #tpu.memory_space<vmem>>, vector<2x16x4xf32>,
    } else {
    }
    return
  }
  func.func @transform_0(%arg0: i32, %arg1: i32) -> (i32, i32, i32) {
    %c0_i32 = arith.constant 0 : i32
    %c0_i32_0 = arith.constant 0 : i32
    %c0_i32_1 = arith.constant 0 : i32
    return %arg0, %c0_i32, %c0_i32_0 : i32, i32, i32
  }
  func.func @transform_1(%arg0: i32, %arg1: i32) -> (i32, i32) {
    %c0_i32 = arith.constant 0 : i32
    %c0_i32_0 = arith.constant 0 : i32
    %c0_i32_1 = arith.constant 0 : i32
    return %c0_i32, %c0_i32_0 : i32, i32
  }
  func.func @transform_2(%arg0: i32, %arg1: i32) -> (i32, i32) {
    %c0_i32 = arith.constant 0 : i32
    %c0_i32_0 = arith.constant 0 : i32
    %c0_i32_1 = arith.constant 0 : i32
    return %c0_i32, %c0_i32_0 : i32, i32
  }
  func.func @transform_3(%arg0: i32, %arg1: i32) -> (i32, i32, i32) {
    %c0_i32 = arith.constant 0 : i32
    %c0_i32_0 = arith.constant 0 : i32
    %c0_i32_1 = arith.constant 0 : i32
    return %arg1, %c0_i32, %c0_i32_0 : i32, i32, i32
  }
  func.func @transform_4(%arg0: i32, %arg1: i32) -> (i32, i32, i32) {
    %c0_i32 = arith.constant 0 : i32
    %c0_i32_0 = arith.constant 0 : i32
    %c0_i32_1 = arith.constant 0 : i32
    return %arg1, %c0_i32, %c0_i32_0 : i32, i32, i32
  }
  func.func @transform_5(%arg0: i32, %arg1: i32) -> (i32, i32, i32) {
    %c0_i32 = arith.constant 0 : i32
    %c0_i32_0 = arith.constant 0 : i32
    %c0_i32_1 = arith.constant 0 : i32
    return %arg1, %c0_i32, %c0_i32_0 : i32, i32, i32
  }
  func.func @transform_6(%arg0: i32, %arg1: i32) -> (i32, i32, i32) {
    %c0_i32 = arith.constant 0 : i32
    %c0_i32_0 = arith.constant 0 : i32
    %c0_i32_1 = arith.constant 0 : i32
    return %arg1, %c0_i32, %c0_i32_0 : i32, i32, i32
  }
  func.func @transform_7(%arg0: i32, %arg1: i32) -> (i32, i32, i32) {
    %c0_i32 = arith.constant 0 : i32
    %c0_i32_0 = arith.constant 0 : i32
    %c0_i32_1 = arith.constant 0 : i32
    return %arg1, %c0_i32, %c0_i32_0 : i32, i32, i32
  }
  func.func @transform_8(%arg0: i32, %arg1: i32) -> (i32, i32, i32) {
    %c0_i32 = arith.constant 0 : i32
    %c0_i32_0 = arith.constant 0 : i32
    %c0_i32_1 = arith.constant 0 : i32
    return %arg1, %c0_i32, %c0_i32_0 : i32, i32, i32
  }
  func.func @transform_9(%arg0: i32, %arg1: i32) -> (i32, i32, i32) {
    %c0_i32 = arith.constant 0 : i32
    %c0_i32_0 = arith.constant 0 : i32
    %c0_i32_1 = arith.constant 0 : i32
    return %arg1, %c0_i32, %c0_i32_0 : i32, i32, i32
  }
  func.func @transform_10(%arg0: i32, %arg1: i32) -> (i32, i32, i32) {
    %c0_i32 = arith.constant 0 : i32
    %c0_i32_0 = arith.constant 0 : i32
    %c0_i32_1 = arith.constant 0 : i32
    return %arg1, %c0_i32, %c0_i32_0 : i32, i32, i32
  }
  func.func @transform_11(%arg0: i32, %arg1: i32) -> (i32, i32, i32) {
    %c0_i32 = arith.constant 0 : i32
    %c0_i32_0 = arith.constant 0 : i32
    %c0_i32_1 = arith.constant 0 : i32
    return %arg1, %c0_i32, %c0_i32_0 : i32, i32, i32
  }
  func.func @transform_12(%arg0: i32, %arg1: i32) -> (i32, i32, i32) {
    %c0_i32 = arith.constant 0 : i32
    %c0_i32_0 = arith.constant 0 : i32
    %c0_i32_1 = arith.constant 0 : i32
    return %arg1, %c0_i32, %c0_i32_0 : i32, i32, i32
  }
  func.func @transform_13(%arg0: i32, %arg1: i32) -> (i32, i32, i32) {
    %c0_i32 = arith.constant 0 : i32
    %c0_i32_0 = arith.constant 0 : i32
    %c0_i32_1 = arith.constant 0 : i32
    return %arg1, %c0_i32, %c0_i32_0 : i32, i32, i32
  }
  func.func @transform_14(%arg0: i32, %arg1: i32) -> (i32, i32, i32) {
    %c0_i32 = arith.constant 0 : i32
    %c0_i32_0 = arith.constant 0 : i32
    %c0_i32_1 = arith.constant 0 : i32
    return %arg1, %c0_i32, %c0_i32_0 : i32, i32, i32
  }
  func.func @transform_15(%arg0: i32, %arg1: i32) -> (i32, i32) {
    %c0_i32 = arith.constant 0 : i32
    %c0_i32_0 = arith.constant 0 : i32
    %c0_i32_1 = arith.constant 0 : i32
    return %c0_i32, %c0_i32_0 : i32, i32
  }
  func.func @transform_16(%arg0: i32, %arg1: i32) -> (i32, i32) {
    %c0_i32 = arith.constant 0 : i32
    %c0_i32_0 = arith.constant 0 : i32
    %c0_i32_1 = arith.constant 0 : i32
    return %c0_i32, %c0_i32_0 : i32, i32
  }
  func.func @transform_17(%arg0: i32, %arg1: i32) -> (i32, i32, i32) {
    %c0_i32 = arith.constant 0 : i32
    %c0_i32_0 = arith.constant 0 : i32
    %c0_i32_1 = arith.constant 0 : i32
    return %arg0, %c0_i32, %c0_i32_0 : i32, i32, i32
  }
}

</mosaic_0001>

<llo_original>
// kernel: tpu_custom_call.1
$region0: #{tpu_custom_call.1}
  #allocation0 [shape = 'u32[]', space=smem, size = 0x4, offset = 0x4, fixed_abs, tag = 'smem constant byte address 0x4 - core index']
  #allocation1 [shape = 'u32[144,128]{1,0:T(1,128)}', space=vmem, size = 0x12000, scoped, tag = 'internal scratch']
  #allocation2 [shape = 'f32[32,32]{1,0:T(8,128)}', space=vmem, size = 0x4000, scoped, tag = 'scratch operand']
  %s0 = inlined_call_operand.vmem [shape: f32[2,16,4], index: 0, kind: input, shape index: {}]
  %s1 = inlined_call_operand.vmem [shape: bf16[4,32], index: 1, kind: input, shape index: {}]
  %s2 = inlined_call_operand.vmem [shape: f32[1,32], index: 2, kind: input, shape index: {}]
  %s3 = inlined_call_operand.vmem [shape: bf16[2,32,96], index: 3, kind: input, shape index: {}]
  %s4 = inlined_call_operand.vmem [shape: f32[2,1,96], index: 4, kind: input, shape index: {}]
  %s5 = inlined_call_operand.vmem [shape: bf16[2,32,32], index: 5, kind: input, shape index: {}]
  %s6 = inlined_call_operand.vmem [shape: f32[2,1,32], index: 6, kind: input, shape index: {}]
  %s7 = inlined_call_operand.vmem [shape: f32[2,1,32], index: 7, kind: input, shape index: {}]
  %s8 = inlined_call_operand.vmem [shape: f32[2,1,32], index: 8, kind: input, shape index: {}]
  %s9 = inlined_call_operand.vmem [shape: bf16[2,32,64], index: 9, kind: input, shape index: {}]
  %s10 = inlined_call_operand.vmem [shape: f32[2,1,64], index: 10, kind: input, shape index: {}]
  %s11 = inlined_call_operand.vmem [shape: bf16[2,64,32], index: 11, kind: input, shape index: {}]
  %s12 = inlined_call_operand.vmem [shape: f32[2,1,32], index: 12, kind: input, shape index: {}]
  %s13 = inlined_call_operand.vmem [shape: f32[2,1,32], index: 13, kind: input, shape index: {}]
  %s14 = inlined_call_operand.vmem [shape: f32[2,1,32], index: 14, kind: input, shape index: {}]
  %s15 = inlined_call_operand.vmem [shape: bf16[32,4], index: 15, kind: input, shape index: {}]
  %s16 = inlined_call_operand.vmem [shape: f32[1,4], index: 16, kind: input, shape index: {}]
  %s17 = inlined_call_operand.vmem [shape: f32[2,16,4], index: 17, kind: output, shape index: {}]
  %s18 = sld [smem:[#allocation0]]
  $region109: #{tpu_custom_call.1} parent=0
    _
  %s20 = ssub.s32 1, %s18
  %s21 = scalar_select 0, %s20, %s18
  loop: start=0, step=1, limit=4
  $region2: #{tpu_custom_call.1} parent=0 // loop_pre_header
    _
  $region3: #{tpu_custom_call.1} parent=0 // loop_header
    %s23 = sphi 0, %s27
    %p24 = scmp.ge.s32.totalorder %s23, 4
    %s30 = sphi 0, %s42
    %s31 = sphi 0, %s38
    %s32 = sphi 0, %s30
    %s33 = sphi 0, %s31
    %s34 = sphi 0, %s32
    %s35 = sphi 0, %s33
    %s45 = sphi 0, %s47
    %s48 = sphi 0, %s45
    %s49 = sphi 0, %s48
    %s65 = sphi 0, %s49
    %s69 = sphi 0, %s69
    %s71 = sphi 0, %s69
    %s72 = sphi 0, %s71
    %s86 = sphi 0, %s72
    %s90 = sphi 0, %s90
    %s92 = sphi 0, %s90
    %s93 = sphi 0, %s92
    %s107 = sphi 0, %s93
    %s113 = sphi 0, %s115
    %s116 = sphi 0, %s113
    %s117 = sphi 0, %s116
    %s133 = sphi 0, %s117
    %s139 = sphi 0, %s141
    %s142 = sphi 0, %s139
    %s143 = sphi 0, %s142
    %s159 = sphi 0, %s143
    %s165 = sphi 0, %s167
    %s168 = sphi 0, %s165
    %s169 = sphi 0, %s168
    %s185 = sphi 0, %s169
    %s191 = sphi 0, %s193
    %s194 = sphi 0, %s191
    %s195 = sphi 0, %s194
    %s211 = sphi 0, %s195
    %s217 = sphi 0, %s219
    %s220 = sphi 0, %s217
    %s221 = sphi 0, %s220
    %s237 = sphi 0, %s221
    %s243 = sphi 0, %s245
    %s246 = sphi 0, %s243
    %s247 = sphi 0, %s246
    %s263 = sphi 0, %s247
    %s269 = sphi 0, %s271
    %s272 = sphi 0, %s269
    %s273 = sphi 0, %s272
    %s289 = sphi 0, %s273
    %s295 = sphi 0, %s297
    %s298 = sphi 0, %s295
    %s299 = sphi 0, %s298
    %s315 = sphi 0, %s299
    %s321 = sphi 0, %s323
    %s324 = sphi 0, %s321
    %s325 = sphi 0, %s324
    %s341 = sphi 0, %s325
    %s347 = sphi 0, %s349
    %s350 = sphi 0, %s347
    %s351 = sphi 0, %s350
    %s367 = sphi 0, %s351
    %s373 = sphi 0, %s375
    %s376 = sphi 0, %s373
    %s377 = sphi 0, %s376
    %s393 = sphi 0, %s377
    %s399 = sphi 0, %s401
    %s402 = sphi 0, %s399
    %s403 = sphi 0, %s402
    %s419 = sphi 0, %s403
    %s423 = sphi 0, %s423
    %s425 = sphi 0, %s423
    %s426 = sphi 0, %s425
    %s440 = sphi 0, %s426
    %s444 = sphi 0, %s444
    %s446 = sphi 0, %s444
    %s447 = sphi 0, %s446
    %s461 = sphi 0, %s447
    %s467 = sphi 0, %s469
    %s470 = sphi 0, %s467
    %s471 = sphi 0, %s470
    %s487 = sphi 0, %s471
  $region4: #{tpu_custom_call.1} parent=0 // loop_header_branch
    %26 = sbr.rel (%p24) target = $region8
  $region5: #{tpu_custom_call.1} parent=0 // loop_body
    %s28 = ssub.s32 %s23, 1
    %s29 = ssub.s32 %s23, 2
    %s36 = sadd.s32 1, %s31
    %p37 = scmp.ge.s32.totalorder %s36, 2
    %s38 = scalar_select %p37, 0, %s36
    %s39 = sadd.s32 1, %s30
    %s40 = scalar_select %p37, %s39, %s30
    %p41 = scmp.ge.s32.totalorder %s40, 1
    %s42 = scalar_select %p41, 0, %s40
    %s43 = ssub.s32 %s30, %s42
    %p44 = scmp.eq.s32.totalorder %s43, 0
    %s46 = sadd.s32 %s45, 1
    %s47 = scalar_select %p44, %s45, %s46
    %p50 = pneg %p44
    %p51 = scmp.eq.s32.totalorder %s23, 1
    %p52 = por %p50, %p51
    %p53 = scmp.ne.s32.totalorder %s45, %s48
    %p54 = scmp.eq.s32.totalorder %s23, 0
    %p55 = por %p53, %p54
    %p56 = scmp.ne.s32.totalorder %s45, %s48
    %p57 = scmp.eq.s32.totalorder %s28, 1
    %p58 = por %p56, %p57
    %p59 = scmp.ne.s32.totalorder %s48, %s49
    %p60 = scmp.eq.s32.totalorder %s28, 0
    %p61 = por %p59, %p60
    %p62 = scmp.ne.s32.totalorder %s48, %s49
    %p63 = scmp.eq.s32.totalorder %s29, 1
    %p64 = por %p62, %p63
    %p66 = scmp.ne.s32.totalorder %s49, %s65
    %p67 = scmp.eq.s32.totalorder %s29, 0
    %p68 = por %p66, %p67
    %s70 = sadd.s32 %s69, 1
    %p73 = scmp.eq.s32.totalorder %s23, 1
    %p74 = scmp.ne.s32.totalorder %s69, %s71
    %p75 = scmp.eq.s32.totalorder %s23, 0
    %p76 = por %p74, %p75
    %p77 = scmp.ne.s32.totalorder %s69, %s71
    %p78 = scmp.eq.s32.totalorder %s28, 1
    %p79 = por %p77, %p78
    %p80 = scmp.ne.s32.totalorder %s71, %s72
    %p81 = scmp.eq.s32.totalorder %s28, 0
    %p82 = por %p80, %p81
    %p83 = scmp.ne.s32.totalorder %s71, %s72
    %p84 = scmp.eq.s32.totalorder %s29, 1
    %p85 = por %p83, %p84
    %p87 = scmp.ne.s32.totalorder %s72, %s86
    %p88 = scmp.eq.s32.totalorder %s29, 0
    %p89 = por %p87, %p88
    %s91 = sadd.s32 %s90, 1
    %p94 = scmp.eq.s32.totalorder %s23, 1
    %p95 = scmp.ne.s32.totalorder %s90, %s92
    %p96 = scmp.eq.s32.totalorder %s23, 0
    %p97 = por %p95, %p96
    %p98 = scmp.ne.s32.totalorder %s90, %s92
    %p99 = scmp.eq.s32.totalorder %s28, 1
    %p100 = por %p98, %p99
    %p101 = scmp.ne.s32.totalorder %s92, %s93
    %p102 = scmp.eq.s32.totalorder %s28, 0
    %p103 = por %p101, %p102
    %p104 = scmp.ne.s32.totalorder %s92, %s93
    %p105 = scmp.eq.s32.totalorder %s29, 1
    %p106 = por %p104, %p105
    %p108 = scmp.ne.s32.totalorder %s93, %s107
    %p109 = scmp.eq.s32.totalorder %s29, 0
    %p110 = por %p108, %p109
    %s111 = ssub.s32 %s31, %s38
    %p112 = scmp.eq.s32.totalorder %s111, 0
    %s114 = sadd.s32 %s113, 1
    %s115 = scalar_select %p112, %s113, %s114
    %p118 = pneg %p112
    %p119 = scmp.eq.s32.totalorder %s23, 1
    %p120 = por %p118, %p119
    %p121 = scmp.ne.s32.totalorder %s113, %s116
    %p122 = scmp.eq.s32.totalorder %s23, 0
    %p123 = por %p121, %p122
    %p124 = scmp.ne.s32.totalorder %s113, %s116
    %p125 = scmp.eq.s32.totalorder %s28, 1
    %p126 = por %p124, %p125
    %p127 = scmp.ne.s32.totalorder %s116, %s117
    %p128 = scmp.eq.s32.totalorder %s28, 0
    %p129 = por %p127, %p128
    %p130 = scmp.ne.s32.totalorder %s116, %s117
    %p131 = scmp.eq.s32.totalorder %s29, 1
    %p132 = por %p130, %p131
    %p134 = scmp.ne.s32.totalorder %s117, %s133
    %p135 = scmp.eq.s32.totalorder %s29, 0
    %p136 = por %p134, %p135
    %s137 = ssub.s32 %s31, %s38
    %p138 = scmp.eq.s32.totalorder %s137, 0
    %s140 = sadd.s32 %s139, 1
    %s141 = scalar_select %p138, %s139, %s140
    %p144 = pneg %p138
    %p145 = scmp.eq.s32.totalorder %s23, 1
    %p146 = por %p144, %p145
    %p147 = scmp.ne.s32.totalorder %s139, %s142
    %p148 = scmp.eq.s32.totalorder %s23, 0
    %p149 = por %p147, %p148
    %p150 = scmp.ne.s32.totalorder %s139, %s142
    %p151 = scmp.eq.s32.totalorder %s28, 1
    %p152 = por %p150, %p151
    %p153 = scmp.ne.s32.totalorder %s142, %s143
    %p154 = scmp.eq.s32.totalorder %s28, 0
    %p155 = por %p153, %p154
    %p156 = scmp.ne.s32.totalorder %s142, %s143
    %p157 = scmp.eq.s32.totalorder %s29, 1
    %p158 = por %p156, %p157
    %p160 = scmp.ne.s32.totalorder %s143, %s159
    %p161 = scmp.eq.s32.totalorder %s29, 0
    %p162 = por %p160, %p161
    %s163 = ssub.s32 %s31, %s38
    %p164 = scmp.eq.s32.totalorder %s163, 0
    %s166 = sadd.s32 %s165, 1
    %s167 = scalar_select %p164, %s165, %s166
    %p170 = pneg %p164
    %p171 = scmp.eq.s32.totalorder %s23, 1
    %p172 = por %p170, %p171
    %p173 = scmp.ne.s32.totalorder %s165, %s168
    %p174 = scmp.eq.s32.totalorder %s23, 0
    %p175 = por %p173, %p174
    %p176 = scmp.ne.s32.totalorder %s165, %s168
    %p177 = scmp.eq.s32.totalorder %s28, 1
    %p178 = por %p176, %p177
    %p179 = scmp.ne.s32.totalorder %s168, %s169
    %p180 = scmp.eq.s32.totalorder %s28, 0
    %p181 = por %p179, %p180
    %p182 = scmp.ne.s32.totalorder %s168, %s169
    %p183 = scmp.eq.s32.totalorder %s29, 1
    %p184 = por %p182, %p183
    %p186 = scmp.ne.s32.totalorder %s169, %s185
    %p187 = scmp.eq.s32.totalorder %s29, 0
    %p188 = por %p186, %p187
    %s189 = ssub.s32 %s31, %s38
    %p190 = scmp.eq.s32.totalorder %s189, 0
    %s192 = sadd.s32 %s191, 1
    %s193 = scalar_select %p190, %s191, %s192
    %p196 = pneg %p190
    %p197 = scmp.eq.s32.totalorder %s23, 1
    %p198 = por %p196, %p197
    %p199 = scmp.ne.s32.totalorder %s191, %s194
    %p200 = scmp.eq.s32.totalorder %s23, 0
    %p201 = por %p199, %p200
    %p202 = scmp.ne.s32.totalorder %s191, %s194
    %p203 = scmp.eq.s32.totalorder %s28, 1
    %p204 = por %p202, %p203
    %p205 = scmp.ne.s32.totalorder %s194, %s195
    %p206 = scmp.eq.s32.totalorder %s28, 0
    %p207 = por %p205, %p206
    %p208 = scmp.ne.s32.totalorder %s194, %s195
    %p209 = scmp.eq.s32.totalorder %s29, 1
    %p210 = por %p208, %p209
    %p212 = scmp.ne.s32.totalorder %s195, %s211
    %p213 = scmp.eq.s32.totalorder %s29, 0
    %p214 = por %p212, %p213
    %s215 = ssub.s32 %s31, %s38
    %p216 = scmp.eq.s32.totalorder %s215, 0
    %s218 = sadd.s32 %s217, 1
    %s219 = scalar_select %p216, %s217, %s218
    %p222 = pneg %p216
    %p223 = scmp.eq.s32.totalorder %s23, 1
    %p224 = por %p222, %p223
    %p225 = scmp.ne.s32.totalorder %s217, %s220
    %p226 = scmp.eq.s32.totalorder %s23, 0
    %p227 = por %p225, %p226
    %p228 = scmp.ne.s32.totalorder %s217, %s220
    %p229 = scmp.eq.s32.totalorder %s28, 1
    %p230 = por %p228, %p229
    %p231 = scmp.ne.s32.totalorder %s220, %s221
    %p232 = scmp.eq.s32.totalorder %s28, 0
    %p233 = por %p231, %p232
    %p234 = scmp.ne.s32.totalorder %s220, %s221
    %p235 = scmp.eq.s32.totalorder %s29, 1
    %p236 = por %p234, %p235
    %p238 = scmp.ne.s32.totalorder %s221, %s237
    %p239 = scmp.eq.s32.totalorder %s29, 0
    %p240 = por %p238, %p239
    %s241 = ssub.s32 %s31, %s38
    %p242 = scmp.eq.s32.totalorder %s241, 0
    %s244 = sadd.s32 %s243, 1
    %s245 = scalar_select %p242, %s243, %s244
    %p248 = pneg %p242
    %p249 = scmp.eq.s32.totalorder %s23, 1
    %p250 = por %p248, %p249
    %p251 = scmp.ne.s32.totalorder %s243, %s246
    %p252 = scmp.eq.s32.totalorder %s23, 0
    %p253 = por %p251, %p252
    %p254 = scmp.ne.s32.totalorder %s243, %s246
    %p255 = scmp.eq.s32.totalorder %s28, 1
    %p256 = por %p254, %p255
    %p257 = scmp.ne.s32.totalorder %s246, %s247
    %p258 = scmp.eq.s32.totalorder %s28, 0
    %p259 = por %p257, %p258
    %p260 = scmp.ne.s32.totalorder %s246, %s247
    %p261 = scmp.eq.s32.totalorder %s29, 1
    %p262 = por %p260, %p261
    %p264 = scmp.ne.s32.totalorder %s247, %s263
    %p265 = scmp.eq.s32.totalorder %s29, 0
    %p266 = por %p264, %p265
    %s267 = ssub.s32 %s31, %s38
    %p268 = scmp.eq.s32.totalorder %s267, 0
    %s270 = sadd.s32 %s269, 1
    %s271 = scalar_select %p268, %s269, %s270
    %p274 = pneg %p268
    %p275 = scmp.eq.s32.totalorder %s23, 1
    %p276 = por %p274, %p275
    %p277 = scmp.ne.s32.totalorder %s269, %s272
    %p278 = scmp.eq.s32.totalorder %s23, 0
    %p279 = por %p277, %p278
    %p280 = scmp.ne.s32.totalorder %s269, %s272
    %p281 = scmp.eq.s32.totalorder %s28, 1
    %p282 = por %p280, %p281
    %p283 = scmp.ne.s32.totalorder %s272, %s273
    %p284 = scmp.eq.s32.totalorder %s28, 0
    %p285 = por %p283, %p284
    %p286 = scmp.ne.s32.totalorder %s272, %s273
    %p287 = scmp.eq.s32.totalorder %s29, 1
    %p288 = por %p286, %p287
    %p290 = scmp.ne.s32.totalorder %s273, %s289
    %p291 = scmp.eq.s32.totalorder %s29, 0
    %p292 = por %p290, %p291
    %s293 = ssub.s32 %s31, %s38
    %p294 = scmp.eq.s32.totalorder %s293, 0
    %s296 = sadd.s32 %s295, 1
    %s297 = scalar_select %p294, %s295, %s296
    %p300 = pneg %p294
    %p301 = scmp.eq.s32.totalorder %s23, 1
    %p302 = por %p300, %p301
    %p303 = scmp.ne.s32.totalorder %s295, %s298
    %p304 = scmp.eq.s32.totalorder %s23, 0
    %p305 = por %p303, %p304
    %p306 = scmp.ne.s32.totalorder %s295, %s298
    %p307 = scmp.eq.s32.totalorder %s28, 1
    %p308 = por %p306, %p307
    %p309 = scmp.ne.s32.totalorder %s298, %s299
    %p310 = scmp.eq.s32.totalorder %s28, 0
    %p311 = por %p309, %p310
    %p312 = scmp.ne.s32.totalorder %s298, %s299
    %p313 = scmp.eq.s32.totalorder %s29, 1
    %p314 = por %p312, %p313
    %p316 = scmp.ne.s32.totalorder %s299, %s315
    %p317 = scmp.eq.s32.totalorder %s29, 0
    %p318 = por %p316, %p317
    %s319 = ssub.s32 %s31, %s38
    %p320 = scmp.eq.s32.totalorder %s319, 0
    %s322 = sadd.s32 %s321, 1
    %s323 = scalar_select %p320, %s321, %s322
    %p326 = pneg %p320
    %p327 = scmp.eq.s32.totalorder %s23, 1
    %p328 = por %p326, %p327
    %p329 = scmp.ne.s32.totalorder %s321, %s324
    %p330 = scmp.eq.s32.totalorder %s23, 0
    %p331 = por %p329, %p330
    %p332 = scmp.ne.s32.totalorder %s321, %s324
    %p333 = scmp.eq.s32.totalorder %s28, 1
    %p334 = por %p332, %p333
    %p335 = scmp.ne.s32.totalorder %s324, %s325
    %p336 = scmp.eq.s32.totalorder %s28, 0
    %p337 = por %p335, %p336
    %p338 = scmp.ne.s32.totalorder %s324, %s325
    %p339 = scmp.eq.s32.totalorder %s29, 1
    %p340 = por %p338, %p339
    %p342 = scmp.ne.s32.totalorder %s325, %s341
    %p343 = scmp.eq.s32.totalorder %s29, 0
    %p344 = por %p342, %p343
    %s345 = ssub.s32 %s31, %s38
    %p346 = scmp.eq.s32.totalorder %s345, 0
    %s348 = sadd.s32 %s347, 1
    %s349 = scalar_select %p346, %s347, %s348
    %p352 = pneg %p346
    %p353 = scmp.eq.s32.totalorder %s23, 1
    %p354 = por %p352, %p353
    %p355 = scmp.ne.s32.totalorder %s347, %s350
    %p356 = scmp.eq.s32.totalorder %s23, 0
    %p357 = por %p355, %p356
    %p358 = scmp.ne.s32.totalorder %s347, %s350
    %p359 = scmp.eq.s32.totalorder %s28, 1
    %p360 = por %p358, %p359
    %p361 = scmp.ne.s32.totalorder %s350, %s351
    %p362 = scmp.eq.s32.totalorder %s28, 0
    %p363 = por %p361, %p362
    %p364 = scmp.ne.s32.totalorder %s350, %s351
    %p365 = scmp.eq.s32.totalorder %s29, 1
    %p366 = por %p364, %p365
    %p368 = scmp.ne.s32.totalorder %s351, %s367
    %p369 = scmp.eq.s32.totalorder %s29, 0
    %p370 = por %p368, %p369
    %s371 = ssub.s32 %s31, %s38
    %p372 = scmp.eq.s32.totalorder %s371, 0
    %s374 = sadd.s32 %s373, 1
    %s375 = scalar_select %p372, %s373, %s374
    %p378 = pneg %p372
    %p379 = scmp.eq.s32.totalorder %s23, 1
    %p380 = por %p378, %p379
    %p381 = scmp.ne.s32.totalorder %s373, %s376
    %p382 = scmp.eq.s32.totalorder %s23, 0
    %p383 = por %p381, %p382
    %p384 = scmp.ne.s32.totalorder %s373, %s376
    %p385 = scmp.eq.s32.totalorder %s28, 1
    %p386 = por %p384, %p385
    %p387 = scmp.ne.s32.totalorder %s376, %s377
    %p388 = scmp.eq.s32.totalorder %s28, 0
    %p389 = por %p387, %p388
    %p390 = scmp.ne.s32.totalorder %s376, %s377
    %p391 = scmp.eq.s32.totalorder %s29, 1
    %p392 = por %p390, %p391
    %p394 = scmp.ne.s32.totalorder %s377, %s393
    %p395 = scmp.eq.s32.totalorder %s29, 0
    %p396 = por %p394, %p395
    %s397 = ssub.s32 %s31, %s38
    %p398 = scmp.eq.s32.totalorder %s397, 0
    %s400 = sadd.s32 %s399, 1
    %s401 = scalar_select %p398, %s399, %s400
    %p404 = pneg %p398
    %p405 = scmp.eq.s32.totalorder %s23, 1
    %p406 = por %p404, %p405
    %p407 = scmp.ne.s32.totalorder %s399, %s402
    %p408 = scmp.eq.s32.totalorder %s23, 0
    %p409 = por %p407, %p408
    %p410 = scmp.ne.s32.totalorder %s399, %s402
    %p411 = scmp.eq.s32.totalorder %s28, 1
    %p412 = por %p410, %p411
    %p413 = scmp.ne.s32.totalorder %s402, %s403
    %p414 = scmp.eq.s32.totalorder %s28, 0
    %p415 = por %p413, %p414
    %p416 = scmp.ne.s32.totalorder %s402, %s403
    %p417 = scmp.eq.s32.totalorder %s29, 1
    %p418 = por %p416, %p417
    %p420 = scmp.ne.s32.totalorder %s403, %s419
    %p421 = scmp.eq.s32.totalorder %s29, 0
    %p422 = por %p420, %p421
    %s424 = sadd.s32 %s423, 1
    %p427 = scmp.eq.s32.totalorder %s23, 1
    %p428 = scmp.ne.s32.totalorder %s423, %s425
    %p429 = scmp.eq.s32.totalorder %s23, 0
    %p430 = por %p428, %p429
    %p431 = scmp.ne.s32.totalorder %s423, %s425
    %p432 = scmp.eq.s32.totalorder %s28, 1
    %p433 = por %p431, %p432
    %p434 = scmp.ne.s32.totalorder %s425, %s426
    %p435 = scmp.eq.s32.totalorder %s28, 0
    %p436 = por %p434, %p435
    %p437 = scmp.ne.s32.totalorder %s425, %s426
    %p438 = scmp.eq.s32.totalorder %s29, 1
    %p439 = por %p437, %p438
    %p441 = scmp.ne.s32.totalorder %s426, %s440
    %p442 = scmp.eq.s32.totalorder %s29, 0
    %p443 = por %p441, %p442
    %s445 = sadd.s32 %s444, 1
    %p448 = scmp.eq.s32.totalorder %s23, 1
    %p449 = scmp.ne.s32.totalorder %s444, %s446
    %p450 = scmp.eq.s32.totalorder %s23, 0
    %p451 = por %p449, %p450
    %p452 = scmp.ne.s32.totalorder %s444, %s446
    %p453 = scmp.eq.s32.totalorder %s28, 1
    %p454 = por %p452, %p453
    %p455 = scmp.ne.s32.totalorder %s446, %s447
    %p456 = scmp.eq.s32.totalorder %s28, 0
    %p457 = por %p455, %p456
    %p458 = scmp.ne.s32.totalorder %s446, %s447
    %p459 = scmp.eq.s32.totalorder %s29, 1
    %p460 = por %p458, %p459
    %p462 = scmp.ne.s32.totalorder %s447, %s461
    %p463 = scmp.eq.s32.totalorder %s29, 0
    %p464 = por %p462, %p463
    %s465 = ssub.s32 %s30, %s42
    %p466 = scmp.eq.s32.totalorder %s465, 0
    %s468 = sadd.s32 %s467, 1
    %s469 = scalar_select %p466, %s467, %s468
    %p472 = pneg %p466
    %p473 = scmp.eq.s32.totalorder %s23, 1
    %p474 = por %p472, %p473
    %p475 = scmp.ne.s32.totalorder %s467, %s470
    %p476 = scmp.eq.s32.totalorder %s23, 0
    %p477 = por %p475, %p476
    %p478 = scmp.ne.s32.totalorder %s467, %s470
    %p479 = scmp.eq.s32.totalorder %s28, 1
    %p480 = por %p478, %p479
    %p481 = scmp.ne.s32.totalorder %s470, %s471
    %p482 = scmp.eq.s32.totalorder %s28, 0
    %p483 = por %p481, %p482
    %p484 = scmp.ne.s32.totalorder %s470, %s471
    %p485 = scmp.eq.s32.totalorder %s29, 1
    %p486 = por %p484, %p485
    %p488 = scmp.ne.s32.totalorder %s471, %s487
    %p489 = scmp.eq.s32.totalorder %s29, 0
    %p490 = por %p488, %p489
    %p491 = scmp.le.s32.totalorder 1, %s23
    %p492 = scmp.lt.s32.totalorder %s23, 3
    %p493 = pnand %p491, %p492
    %p494 = pneg %p493
    // Predicated region
    $region9: #{tpu_custom_call.1} parent=5 // pred_check
      _
    $region10: #{tpu_custom_call.1} parent=5 // pred_check_branch
      %496 = sbr.rel (%p493) target = $region12
    $region11: #{tpu_custom_call.1} parent=5 // pred_region
      %s497 = ssub.s32 %s23, 1
      // Predicated region
      $region13: #{tpu_custom_call.1} parent=11 // pred_check
        %p498 = pneg %p61
      $region14: #{tpu_custom_call.1} parent=11 // pred_check_branch
        %500 = sbr.rel (%p498) target = $region16
      $region15: #{tpu_custom_call.1} parent=11 // pred_region
        %s501 = smul.u32 2, %s32
        %p502 = scmp.lt.s32.totalorder %s501, 1
        %s503 = scalar_select %p502, %s501, 1
        %s504 = smul.addr %s503, 2
        %s505 = smul.addr %s504, 8
        %s506 = scalar_lea.vmem %s0, %s505
        %s507 = smul.u32 2, %s32
      $region16: #{tpu_custom_call.1} parent=11 // pred_fallthru
        _
      // Predicated region
      $region17: #{tpu_custom_call.1} parent=11 // pred_check
        %p508 = pneg %p82
      $region18: #{tpu_custom_call.1} parent=11 // pred_check_branch
        %510 = sbr.rel (%p508) target = $region20
      $region19: #{tpu_custom_call.1} parent=11 // pred_region
        _
      $region20: #{tpu_custom_call.1} parent=11 // pred_fallthru
        _
      // Predicated region
      $region21: #{tpu_custom_call.1} parent=11 // pred_check
        %p511 = pneg %p103
      $region22: #{tpu_custom_call.1} parent=11 // pred_check_branch
        %513 = sbr.rel (%p511) target = $region24
      $region23: #{tpu_custom_call.1} parent=11 // pred_region
        _
      $region24: #{tpu_custom_call.1} parent=11 // pred_fallthru
        _
      // Predicated region
      $region25: #{tpu_custom_call.1} parent=11 // pred_check
        %p514 = pneg %p436
      $region26: #{tpu_custom_call.1} parent=11 // pred_check_branch
        %516 = sbr.rel (%p514) target = $region28
      $region27: #{tpu_custom_call.1} parent=11 // pred_region
        _
      $region28: #{tpu_custom_call.1} parent=11 // pred_fallthru
        _
      // Predicated region
      $region29: #{tpu_custom_call.1} parent=11 // pred_check
        %p517 = pneg %p457
      $region30: #{tpu_custom_call.1} parent=11 // pred_check_branch
        %519 = sbr.rel (%p517) target = $region32
      $region31: #{tpu_custom_call.1} parent=11 // pred_region
        _
      $region32: #{tpu_custom_call.1} parent=11 // pred_fallthru
        _
    $region12: #{tpu_custom_call.1} parent=5 // pred_fallthru
      _
    %p520 = scmp.lt.s32.totalorder %s23, 2
    // Predicated region
    $region33: #{tpu_custom_call.1} parent=5 // pred_check
      %p521 = pneg %p520
    $region34: #{tpu_custom_call.1} parent=5 // pred_check_branch
      %523 = sbr.rel (%p521) target = $region36
    $region35: #{tpu_custom_call.1} parent=5 // pred_region
      // Predicated region
      $region37: #{tpu_custom_call.1} parent=35 // pred_check
        %p524 = pneg %p123
      $region38: #{tpu_custom_call.1} parent=35 // pred_check_branch
        %526 = sbr.rel (%p524) target = $region40
      $region39: #{tpu_custom_call.1} parent=35 // pred_region
        %p527 = scmp.lt.s32.totalorder %s31, 1
        %s528 = scalar_select %p527, %s31, 1
        %s529 = smul.addr %s528, 4
        %s530 = smul.addr %s529, 4
        %s531 = scalar_lea.vmem %s3, %s530
      $region40: #{tpu_custom_call.1} parent=35 // pred_fallthru
        _
      // Predicated region
      $region41: #{tpu_custom_call.1} parent=35 // pred_check
        %p532 = pneg %p149
      $region42: #{tpu_custom_call.1} parent=35 // pred_check_branch
        %534 = sbr.rel (%p532) target = $region44
      $region43: #{tpu_custom_call.1} parent=35 // pred_region
        %p535 = scmp.lt.s32.totalorder %s31, 1
        %s536 = scalar_select %p535, %s31, 1
        %s537 = scalar_lea.vmem %s4, %s536
      $region44: #{tpu_custom_call.1} parent=35 // pred_fallthru
        _
      // Predicated region
      $region45: #{tpu_custom_call.1} parent=35 // pred_check
        %p538 = pneg %p175
      $region46: #{tpu_custom_call.1} parent=35 // pred_check_branch
        %540 = sbr.rel (%p538) target = $region48
      $region47: #{tpu_custom_call.1} parent=35 // pred_region
        %p541 = scmp.lt.s32.totalorder %s31, 1
        %s542 = scalar_select %p541, %s31, 1
        %s543 = smul.addr %s542, 4
        %s544 = smul.addr %s543, 4
        %s545 = scalar_lea.vmem %s5, %s544
      $region48: #{tpu_custom_call.1} parent=35 // pred_fallthru
        _
      // Predicated region
      $region49: #{tpu_custom_call.1} parent=35 // pred_check
        %p546 = pneg %p201
      $region50: #{tpu_custom_call.1} parent=35 // pred_check_branch
        %548 = sbr.rel (%p546) target = $region52
      $region51: #{tpu_custom_call.1} parent=35 // pred_region
        %p549 = scmp.lt.s32.totalorder %s31, 1
        %s550 = scalar_select %p549, %s31, 1
        %s551 = scalar_lea.vmem %s6, %s550
      $region52: #{tpu_custom_call.1} parent=35 // pred_fallthru
        _
      // Predicated region
      $region53: #{tpu_custom_call.1} parent=35 // pred_check
        %p552 = pneg %p227
      $region54: #{tpu_custom_call.1} parent=35 // pred_check_branch
        %554 = sbr.rel (%p552) target = $region56
      $region55: #{tpu_custom_call.1} parent=35 // pred_region
        %p555 = scmp.lt.s32.totalorder %s31, 1
        %s556 = scalar_select %p555, %s31, 1
        %s557 = scalar_lea.vmem %s7, %s556
      $region56: #{tpu_custom_call.1} parent=35 // pred_fallthru
        _
      // Predicated region
      $region57: #{tpu_custom_call.1} parent=35 // pred_check
        %p558 = pneg %p253
      $region58: #{tpu_custom_call.1} parent=35 // pred_check_branch
        %560 = sbr.rel (%p558) target = $region60
      $region59: #{tpu_custom_call.1} parent=35 // pred_region
        %p561 = scmp.lt.s32.totalorder %s31, 1
        %s562 = scalar_select %p561, %s31, 1
        %s563 = scalar_lea.vmem %s8, %s562
      $region60: #{tpu_custom_call.1} parent=35 // pred_fallthru
        _
      // Predicated region
      $region61: #{tpu_custom_call.1} parent=35 // pred_check
        %p564 = pneg %p279
      $region62: #{tpu_custom_call.1} parent=35 // pred_check_branch
        %566 = sbr.rel (%p564) target = $region64
      $region63: #{tpu_custom_call.1} parent=35 // pred_region
        %p567 = scmp.lt.s32.totalorder %s31, 1
        %s568 = scalar_select %p567, %s31, 1
        %s569 = smul.addr %s568, 4
        %s570 = smul.addr %s569, 4
        %s571 = scalar_lea.vmem %s9, %s570
      $region64: #{tpu_custom_call.1} parent=35 // pred_fallthru
        _
      // Predicated region
      $region65: #{tpu_custom_call.1} parent=35 // pred_check
        %p572 = pneg %p305
      $region66: #{tpu_custom_call.1} parent=35 // pred_check_branch
        %574 = sbr.rel (%p572) target = $region68
      $region67: #{tpu_custom_call.1} parent=35 // pred_region
        %p575 = scmp.lt.s32.totalorder %s31, 1
        %s576 = scalar_select %p575, %s31, 1
        %s577 = scalar_lea.vmem %s10, %s576
      $region68: #{tpu_custom_call.1} parent=35 // pred_fallthru
        _
      // Predicated region
      $region69: #{tpu_custom_call.1} parent=35 // pred_check
        %p578 = pneg %p331
      $region70: #{tpu_custom_call.1} parent=35 // pred_check_branch
        %580 = sbr.rel (%p578) target = $region72
      $region71: #{tpu_custom_call.1} parent=35 // pred_region
        %p581 = scmp.lt.s32.totalorder %s31, 1
        %s582 = scalar_select %p581, %s31, 1
        %s583 = smul.addr %s582, 8
        %s584 = smul.addr %s583, 4
        %s585 = scalar_lea.vmem %s11, %s584
      $region72: #{tpu_custom_call.1} parent=35 // pred_fallthru
        _
      // Predicated region
      $region73: #{tpu_custom_call.1} parent=35 // pred_check
        %p586 = pneg %p357
      $region74: #{tpu_custom_call.1} parent=35 // pred_check_branch
        %588 = sbr.rel (%p586) target = $region76
      $region75: #{tpu_custom_call.1} parent=35 // pred_region
        %p589 = scmp.lt.s32.totalorder %s31, 1
        %s590 = scalar_select %p589, %s31, 1
        %s591 = scalar_lea.vmem %s12, %s590
      $region76: #{tpu_custom_call.1} parent=35 // pred_fallthru
        _
      // Predicated region
      $region77: #{tpu_custom_call.1} parent=35 // pred_check
        %p592 = pneg %p383
      $region78: #{tpu_custom_call.1} parent=35 // pred_check_branch
        %594 = sbr.rel (%p592) target = $region80
      $region79: #{tpu_custom_call.1} parent=35 // pred_region
        %p595 = scmp.lt.s32.totalorder %s31, 1
        %s596 = scalar_select %p595, %s31, 1
        %s597 = scalar_lea.vmem %s13, %s596
      $region80: #{tpu_custom_call.1} parent=35 // pred_fallthru
        _
      // Predicated region
      $region81: #{tpu_custom_call.1} parent=35 // pred_check
        %p598 = pneg %p409
      $region82: #{tpu_custom_call.1} parent=35 // pred_check_branch
        %600 = sbr.rel (%p598) target = $region84
      $region83: #{tpu_custom_call.1} parent=35 // pred_region
        %p601 = scmp.lt.s32.totalorder %s31, 1
        %s602 = scalar_select %p601, %s31, 1
        %s603 = scalar_lea.vmem %s14, %s602
      $region84: #{tpu_custom_call.1} parent=35 // pred_fallthru
        _
    $region36: #{tpu_custom_call.1} parent=5 // pred_fallthru
      _
    %p604 = scmp.le.s32.totalorder 1, %s23
    %p605 = scmp.lt.s32.totalorder %s23, 3
    %p606 = pnand %p604, %p605
    %p607 = pneg %p606
    // Predicated region
    $region85: #{tpu_custom_call.1} parent=5 // pred_check
      _
    $region86: #{tpu_custom_call.1} parent=5 // pred_check_branch
      %609 = sbr.rel (%p606) target = $region88
    $region87: #{tpu_custom_call.1} parent=5 // pred_region
      %s610 = ssub.s32 %s23, 1
      %s611 = smul.u32 2, %s32
      %p612 = scmp.lt.s32.totalorder %s611, 1
      %s613 = scalar_select %p612, %s611, 1
      %s614 = smul.addr %s613, 2
      %s615 = smul.addr %s614, 8
      %s616 = scalar_lea.vmem %s0, %s615
      %p617 = pneg %p61
      %p618 = pneg %p58
      %p619 = pneg %p82
      %p620 = pneg %p79
      %p621 = pneg %p103
      %p622 = pneg %p100
      %p623 = scmp.lt.s32.totalorder %s33, 1
      %s624 = scalar_select %p623, %s33, 1
      %s625 = smul.addr %s624, 4
      %s626 = smul.addr %s625, 4
      %s627 = scalar_lea.vmem %s3, %s626
      %p628 = pneg %p129
      %p629 = pneg %p126
      %p630 = scmp.lt.s32.totalorder %s33, 1
      %s631 = scalar_select %p630, %s33, 1
      %s632 = scalar_lea.vmem %s4, %s631
      %p633 = pneg %p155
      %p634 = pneg %p152
      %p635 = scmp.lt.s32.totalorder %s33, 1
      %s636 = scalar_select %p635, %s33, 1
      %s637 = smul.addr %s636, 4
      %s638 = smul.addr %s637, 4
      %s639 = scalar_lea.vmem %s5, %s638
      %p640 = pneg %p181
      %p641 = pneg %p178
      %p642 = scmp.lt.s32.totalorder %s33, 1
      %s643 = scalar_select %p642, %s33, 1
      %s644 = scalar_lea.vmem %s6, %s643
      %p645 = pneg %p207
      %p646 = pneg %p204
      %p647 = scmp.lt.s32.totalorder %s33, 1
      %s648 = scalar_select %p647, %s33, 1
      %s649 = scalar_lea.vmem %s7, %s648
      %p650 = pneg %p233
      %p651 = pneg %p230
      %p652 = scmp.lt.s32.totalorder %s33, 1
      %s653 = scalar_select %p652, %s33, 1
      %s654 = scalar_lea.vmem %s8, %s653
      %p655 = pneg %p259
      %p656 = pneg %p256
      %p657 = scmp.lt.s32.totalorder %s33, 1
      %s658 = scalar_select %p657, %s33, 1
      %s659 = smul.addr %s658, 4
      %s660 = smul.addr %s659, 4
      %s661 = scalar_lea.vmem %s9, %s660
      %p662 = pneg %p285
      %p663 = pneg %p282
      %p664 = scmp.lt.s32.totalorder %s33, 1
      %s665 = scalar_select %p664, %s33, 1
      %s666 = scalar_lea.vmem %s10, %s665
      %p667 = pneg %p311
      %p668 = pneg %p308
      %p669 = scmp.lt.s32.totalorder %s33, 1
      %s670 = scalar_select %p669, %s33, 1
      %s671 = smul.addr %s670, 8
      %s672 = smul.addr %s671, 4
      %s673 = scalar_lea.vmem %s11, %s672
      %p674 = pneg %p337
      %p675 = pneg %p334
      %p676 = scmp.lt.s32.totalorder %s33, 1
      %s677 = scalar_select %p676, %s33, 1
      %s678 = scalar_lea.vmem %s12, %s677
      %p679 = pneg %p363
      %p680 = pneg %p360
      %p681 = scmp.lt.s32.totalorder %s33, 1
      %s682 = scalar_select %p681, %s33, 1
      %s683 = scalar_lea.vmem %s13, %s682
      %p684 = pneg %p389
      %p685 = pneg %p386
      %p686 = scmp.lt.s32.totalorder %s33, 1
      %s687 = scalar_select %p686, %s33, 1
      %s688 = scalar_lea.vmem %s14, %s687
      %p689 = pneg %p415
      %p690 = pneg %p412
      %p691 = pneg %p436
      %p692 = pneg %p433
      %p693 = pneg %p457
      %p694 = pneg %p454
      %p695 = pneg %p483
      %p696 = pneg %p480
      %s697 = smul.u32 2, %s32
      %p698 = scmp.lt.s32.totalorder %s697, 1
      %s699 = scalar_select %p698, %s697, 1
      %s700 = smul.addr %s699, 2
      %s701 = smul.addr %s700, 8
      %s702 = scalar_lea.vmem %s17, %s701
      %s703 = smul.u32 2, %s32
      %p704 = scmp.lt.s32.totalorder %s703, 1
      %s705 = scalar_select %p704, %s703, 1
      %s706 = smul.addr %s705, 2
      %s707 = smul.addr %s706, 8
      %s708 = scalar_lea.vmem %s0, %s707
      %s709 = smul.u32 2, %s32
      %p710 = scmp.lt.s32.totalorder %s33, 1
      %s711 = scalar_select %p710, %s33, 1
      %s712 = smul.addr %s711, 4
      %s713 = smul.addr %s712, 4
      %s714 = scalar_lea.vmem %s3, %s713
      %p715 = scmp.lt.s32.totalorder %s33, 1
      %s716 = scalar_select %p715, %s33, 1
      %s717 = scalar_lea.vmem %s4, %s716
      %p718 = scmp.lt.s32.totalorder %s33, 1
      %s719 = scalar_select %p718, %s33, 1
      %s720 = smul.addr %s719, 4
      %s721 = smul.addr %s720, 4
      %s722 = scalar_lea.vmem %s5, %s721
      %p723 = scmp.lt.s32.totalorder %s33, 1
      %s724 = scalar_select %p723, %s33, 1
      %s725 = scalar_lea.vmem %s6, %s724
      %p726 = scmp.lt.s32.totalorder %s33, 1
      %s727 = scalar_select %p726, %s33, 1
      %s728 = scalar_lea.vmem %s7, %s727
      %p729 = scmp.lt.s32.totalorder %s33, 1
      %s730 = scalar_select %p729, %s33, 1
      %s731 = scalar_lea.vmem %s8, %s730
      %p732 = scmp.lt.s32.totalorder %s33, 1
      %s733 = scalar_select %p732, %s33, 1
      %s734 = smul.addr %s733, 4
      %s735 = smul.addr %s734, 4
      %s736 = scalar_lea.vmem %s9, %s735
      %p737 = scmp.lt.s32.totalorder %s33, 1
      %s738 = scalar_select %p737, %s33, 1
      %s739 = scalar_lea.vmem %s10, %s738
      %p740 = scmp.lt.s32.totalorder %s33, 1
      %s741 = scalar_select %p740, %s33, 1
      %s742 = smul.addr %s741, 8
      %s743 = smul.addr %s742, 4
      %s744 = scalar_lea.vmem %s11, %s743
      %p745 = scmp.lt.s32.totalorder %s33, 1
      %s746 = scalar_select %p745, %s33, 1
      %s747 = scalar_lea.vmem %s12, %s746
      %p748 = scmp.lt.s32.totalorder %s33, 1
      %s749 = scalar_select %p748, %s33, 1
      %s750 = scalar_lea.vmem %s13, %s749
      %p751 = scmp.lt.s32.totalorder %s33, 1
      %s752 = scalar_select %p751, %s33, 1
      %s753 = scalar_lea.vmem %s14, %s752
      %s754 = smul.u32 2, %s32
      %p755 = scmp.lt.s32.totalorder %s754, 1
      %s756 = scalar_select %p755, %s754, 1
      %s757 = smul.addr %s756, 2
      %s758 = smul.addr %s757, 8
      %s759 = scalar_lea.vmem %s17, %s758
      %s760 = smul.u32 2, %s32
      %p762 = scmp.eq.s32.totalorder %s33, 0
      // Predicated region
      $region89: #{tpu_custom_call.1} parent=87 // pred_check
        %p763 = pneg %p762
      $region90: #{tpu_custom_call.1} parent=87 // pred_check_branch
        %765 = sbr.rel (%p763) target = $region92
      $region91: #{tpu_custom_call.1} parent=87 // pred_region
        %v766 = vld [vmem:[%s708] sm:$0xff]
        %v767 = vld [vmem:[%s708 + $0x8] sm:$0xff]
        %v768 = vld [vmem:[%s708 + $0x10] sm:$0xff]
        %v769 = vld [vmem:[%s708 + $0x18] sm:$0xff]
        %v770 = vpack.c.bf16 %v767, %v766
        %v771 = vpack.c.bf16 %v769, %v768
        %v772 = vld [vmem:[%s1] sm:$0x3]
        %v773 = vld [vmem:[%s2] sm:$0x1]
        %v775 = vlaneseq
        %v776 = vshrl.u32 %v775, 7
        %v777 = vsub.s32 0, %v776
        %v778 = vrot.slane %v773, %v777
        %vm780 = vcmask 31744
        %v782 = vsel %vm780, %v770, 0
        %v785 = vsel %vm780, %v771, 0
        %vm787 = vcmask 1041408
        %v789 = vsel %vm787, %v772, 0
        %791 = vmatprep.subr.bf16.mxu0 0
        %792 = vmatpush1.bf16.msra.mxu0 0
        %793 = vmatprep.subr.bf16.mxu0 0
        %794 = vmatpush1.bf16.msra.mxu0 0
        %795 = vmatprep.subr.bf16.mxu0 0
        %796 = vmatpush1.bf16.msra.mxu0 0
        %797 = vmatprep.subr.bf16.mxu0 0
        %798 = vmatpush1.bf16.msra.mxu0 0
        %799 = vmatprep.subr.bf16.mxu0 0
        %800 = vmatpush1.bf16.msra.mxu0 0
        %801 = vmatprep.subr.bf16.mxu0 0
        %802 = vmatpush1.bf16.msra.mxu0 0
        %803 = vmatprep.subr.bf16.mxu0 0
        %804 = vmatpush1.bf16.msra.mxu0 0
        %805 = vmatprep.subr.bf16.mxu0 0
        %806 = vmatpush1.bf16.msra.mxu0 %v789
        %807 = vmatprep.subr.bf16.mxu0 0
        %808 = vmatpush2.bf16.msra.mxu0 0
        %809 = vmatprep.subr.bf16.mxu0 0
        %810 = vmatpush2.bf16.msra.mxu0 0
        %811 = vmatprep.subr.bf16.mxu0 0
        %812 = vmatpush2.bf16.msra.mxu0 0
        %813 = vmatprep.subr.bf16.mxu0 0
        %814 = vmatpush2.bf16.msra.mxu0 0
        %815 = vmatprep.subr.bf16.mxu0 0
        %816 = vmatpush2.bf16.msra.mxu0 0
        %817 = vmatprep.subr.bf16.mxu0 0
        %818 = vmatpush2.bf16.msra.mxu0 0
        %819 = vmatprep.subr.bf16.mxu0 0
        %820 = vmatpush2.bf16.msra.mxu0 0
        %821 = vmatprep.subr.bf16.mxu0 0
        %822 = vmatpush2.bf16.msra.mxu0 0
        %823 = vmatprep.mubr.bf16.mxu0 0
        %824 = vmatmul.mubr.bf16.gmra.mxu0 %v782
        %v825 = vpop.f32.mrf.mxu0
        %v826 = vadd.f32 %v778, %v825
        %v827 = vpop.f32.mrf.mxu0
        %v828 = vpop.f32.mrf.mxu0
        %v829 = vadd.f32 %v778, %v828
        %v830 = vpop.f32.mrf.mxu0
        %831 = vmatprep.mubr.bf16.mxu0 0
        %832 = vmatmul.mubr.bf16.gmra.mxu0 %v785
        %v833 = vpop.f32.mrf.mxu0
        %v834 = vadd.f32 %v778, %v833
        %v835 = vpop.f32.mrf.mxu0
        %v836 = vpop.f32.mrf.mxu0
        %v837 = vadd.f32 %v778, %v836
        %v838 = vpop.f32.mrf.mxu0
        %839 = vdwg.mxu0
        %vm840 = vcmask 261120
        %841 = vst.msk [vmem:[#allocation2] sm:$0xff] %vm840, %v826
        %842 = vst.msk [vmem:[#allocation2 + $0x8] sm:$0xff] %vm840, %v829
        %843 = vst.msk [vmem:[#allocation2 + $0x10] sm:$0xff] %vm840, %v834
        %844 = vst.msk [vmem:[#allocation2 + $0x18] sm:$0xff] %vm840, %v837
      $region92: #{tpu_custom_call.1} parent=87 // pred_fallthru
        _
      %v845 = vld [vmem:[#allocation2] sm:$0xff]
      %v846 = vld [vmem:[#allocation2 + $0x8] sm:$0xff]
      %v847 = vld [vmem:[#allocation2 + $0x10] sm:$0xff]
      %v848 = vld [vmem:[#allocation2 + $0x18] sm:$0xff]
      %v849 = vpack.c.bf16 %v846, %v845
      %v850 = vpack.c.bf16 %v848, %v847
      %v851 = vld [vmem:[%s714] sm:$0xf]
      %v852 = vld [vmem:[%s714 + $0x4] sm:$0xf]
      %v853 = vld [vmem:[%s714 + $0x8] sm:$0xf]
      %v854 = vld [vmem:[%s714 + $0xc] sm:$0xf]
      %v855 = vld [vmem:[%s717] sm:$0x1]
      %v857 = vlaneseq
      %v858 = vshrl.u32 %v857, 7
      %v859 = vsub.s32 0, %v858
      %v860 = vrot.slane %v855, %v859
      %v866 = vunpack.c.l.b16 %v851
      %v867 = vunpack.c.l.b16 %v852
      %v868 = vunpack.c.l.b16 %v853
      %v869 = vunpack.c.l.b16 %v854
      %v870 = vpack.c.b16 %v867, %v866
      %v871 = vpack.c.b16 %v869, %v868
      %vm874 = vcmask 261120
      %v876 = vsel %vm874, %v849, 0
      %v879 = vsel %vm874, %v850, 0
      %881 = vmatprep.subr.bf16.mxu0 0
      %882 = vmatpush1.bf16.msra.mxu0 0
      %883 = vmatprep.subr.bf16.mxu0 0
      %884 = vmatpush1.bf16.msra.mxu0 0
      %885 = vmatprep.subr.bf16.mxu0 0
      %886 = vmatpush1.bf16.msra.mxu0 0
      %887 = vmatprep.subr.bf16.mxu0 0
      %888 = vmatpush1.bf16.msra.mxu0 0
      %889 = vmatprep.subr.bf16.mxu0 0
      %890 = vmatpush1.bf16.msra.mxu0 0
      %891 = vmatprep.subr.bf16.mxu0 0
      %892 = vmatpush1.bf16.msra.mxu0 0
      %893 = vmatprep.subr.bf16.mxu0 0
      %894 = vmatpush1.bf16.msra.mxu0 %v871
      %895 = vmatprep.subr.bf16.mxu0 0
      %896 = vmatpush1.bf16.msra.mxu0 %v870
      %897 = vmatprep.subr.bf16.mxu0 0
      %898 = vmatpush2.bf16.msra.mxu0 0
      %899 = vmatprep.subr.bf16.mxu0 0
      %900 = vmatpush2.bf16.msra.mxu0 0
      %901 = vmatprep.subr.bf16.mxu0 0
      %902 = vmatpush2.bf16.msra.mxu0 0
      %903 = vmatprep.subr.bf16.mxu0 0
      %904 = vmatpush2.bf16.msra.mxu0 0
      %905 = vmatprep.subr.bf16.mxu0 0
      %906 = vmatpush2.bf16.msra.mxu0 0
      %907 = vmatprep.subr.bf16.mxu0 0
      %908 = vmatpush2.bf16.msra.mxu0 0
      %909 = vmatprep.subr.bf16.mxu0 0
      %910 = vmatpush2.bf16.msra.mxu0 0
      %911 = vmatprep.subr.bf16.mxu0 0
      %912 = vmatpush2.bf16.msra.mxu0 0
      %913 = vmatprep.mubr.bf16.mxu0 0
      %914 = vmatmul.mubr.bf16.gmra.mxu0 %v876
      %v915 = vpop.f32.mrf.mxu0
      %v916 = vadd.f32 %v860, %v915
      %v917 = vpop.f32.mrf.mxu0
      %v918 = vpop.f32.mrf.mxu0
      %v919 = vadd.f32 %v860, %v918
      %v920 = vpop.f32.mrf.mxu0
      %921 = vmatprep.mubr.bf16.mxu0 0
      %922 = vmatmul.mubr.bf16.gmra.mxu0 %v879
      %v923 = vpop.f32.mrf.mxu0
      %v924 = vadd.f32 %v860, %v923
      %v925 = vpop.f32.mrf.mxu0
      %v926 = vpop.f32.mrf.mxu0
      %v927 = vadd.f32 %v860, %v926
      %v928 = vpop.f32.mrf.mxu0
      %929 = vdwg.mxu0
      %v930 = vpack.c.bf16 %v919, %v916
      %v931 = vpack.c.bf16 %v927, %v924
      %933 = vrot.lane.b32.xlu0 %v930, 96
      %v934 = vpop.permute.xlu0 %933
      %vm935 = vcmask 64512
      %v937 = vsel %vm935, %v930, 0
      %v940 = vsel %vm935, %v934, 0
      %942 = vmatprep.subr.bf16.mxu0 0
      %943 = vmatpush1.bf16.xpose.msra.mxu0 0
      %944 = vmatprep.subr.bf16.mxu0 0
      %945 = vmatpush1.bf16.xpose.msra.mxu0 0
      %946 = vmatprep.subr.bf16.mxu0 0
      %947 = vmatpush1.bf16.xpose.msra.mxu0 0
      %948 = vmatprep.subr.bf16.mxu0 0
      %949 = vmatpush1.bf16.xpose.msra.mxu0 0
      %950 = vmatprep.subr.bf16.mxu0 0
      %951 = vmatpush1.bf16.xpose.msra.mxu0 0
      %952 = vmatprep.subr.bf16.mxu0 0
      %953 = vmatpush1.bf16.xpose.msra.mxu0 0
      %954 = vmatprep.subr.bf16.mxu0 0
      %955 = vmatpush1.bf16.xpose.msra.mxu0 0
      %956 = vmatprep.subr.bf16.mxu0 0
      %957 = vmatpush1.bf16.xpose.msra.mxu0 %v940
      %958 = vmatprep.subr.bf16.mxu0 0
      %959 = vmatpush2.bf16.xpose.msra.mxu0 0
      %960 = vmatprep.subr.bf16.mxu0 0
      %961 = vmatpush2.bf16.xpose.msra.mxu0 0
      %962 = vmatprep.subr.bf16.mxu0 0
      %963 = vmatpush2.bf16.xpose.msra.mxu0 0
      %964 = vmatprep.subr.bf16.mxu0 0
      %965 = vmatpush2.bf16.xpose.msra.mxu0 0
      %966 = vmatprep.subr.bf16.mxu0 0
      %967 = vmatpush2.bf16.xpose.msra.mxu0 0
      %968 = vmatprep.subr.bf16.mxu0 0
      %969 = vmatpush2.bf16.xpose.msra.mxu0 0
      %970 = vmatprep.subr.bf16.mxu0 0
      %971 = vmatpush2.bf16.xpose.msra.mxu0 0
      %972 = vmatprep.subr.bf16.mxu0 0
      %973 = vmatpush2.bf16.xpose.msra.mxu0 0
      %974 = vmatprep.mubr.bf16.mxu0 0
      %975 = vmatmul.mubr.bf16.gmra.mxu0 %v937
      %v976 = vpop.f32.mrf.mxu0
      %v977 = vadd.f32 0.0, %v976
      %v978 = vpop.f32.mrf.mxu0
      %v979 = vpop.f32.mrf.mxu0
      %v980 = vadd.f32 0.0, %v979
      %v981 = vpop.f32.mrf.mxu0
      %982 = vdwg.mxu0
      %984 = vrot.lane.b32.xlu0 %v931, 96
      %v985 = vpop.permute.xlu0 %984
      %v987 = vsel %vm935, %v931, 0
      %v990 = vsel %vm935, %v985, 0
      %992 = vmatprep.subr.bf16.mxu0 0
      %993 = vmatpush1.bf16.xpose.msra.mxu0 0
      %994 = vmatprep.subr.bf16.mxu0 0
      %995 = vmatpush1.bf16.xpose.msra.mxu0 0
      %996 = vmatprep.subr.bf16.mxu0 0
      %997 = vmatpush1.bf16.xpose.msra.mxu0 0
      %998 = vmatprep.subr.bf16.mxu0 0
      %999 = vmatpush1.bf16.xpose.msra.mxu0 0
      %1000 = vmatprep.subr.bf16.mxu0 0
      %1001 = vmatpush1.bf16.xpose.msra.mxu0 0
      %1002 = vmatprep.subr.bf16.mxu0 0
      %1003 = vmatpush1.bf16.xpose.msra.mxu0 0
      %1004 = vmatprep.subr.bf16.mxu0 0
      %1005 = vmatpush1.bf16.xpose.msra.mxu0 0
      %1006 = vmatprep.subr.bf16.mxu0 0
      %1007 = vmatpush1.bf16.xpose.msra.mxu0 %v990
      %1008 = vmatprep.subr.bf16.mxu0 0
      %1009 = vmatpush2.bf16.xpose.msra.mxu0 0
      %1010 = vmatprep.subr.bf16.mxu0 0
      %1011 = vmatpush2.bf16.xpose.msra.mxu0 0
      %1012 = vmatprep.subr.bf16.mxu0 0
      %1013 = vmatpush2.bf16.xpose.msra.mxu0 0
      %1014 = vmatprep.subr.bf16.mxu0 0
      %1015 = vmatpush2.bf16.xpose.msra.mxu0 0
      %1016 = vmatprep.subr.bf16.mxu0 0
      %1017 = vmatpush2.bf16.xpose.msra.mxu0 0
      %1018 = vmatprep.subr.bf16.mxu0 0
      %1019 = vmatpush2.bf16.xpose.msra.mxu0 0
      %1020 = vmatprep.subr.bf16.mxu0 0
      %1021 = vmatpush2.bf16.xpose.msra.mxu0 0
      %1022 = vmatprep.subr.bf16.mxu0 0
      %1023 = vmatpush2.bf16.xpose.msra.mxu0 0
      %1024 = vmatprep.mubr.bf16.mxu0 0
      %1025 = vmatmul.mubr.bf16.gmra.mxu0 %v987
      %v1026 = vpop.f32.mrf.mxu0
      %v1027 = vadd.f32 0.0, %v1026
      %v1028 = vpop.f32.mrf.mxu0
      %v1029 = vpop.f32.mrf.mxu0
      %v1030 = vadd.f32 0.0, %v1029
      %v1031 = vpop.f32.mrf.mxu0
      %1032 = vdwg.mxu0
      %v1033 = vmul.f32 %v977, 0.35355338
      %v1034 = vmul.f32 %v980, 0.35355338
      %v1035 = vmul.f32 %v1027, 0.35355338
      %v1036 = vmul.f32 %v1030, 0.35355338
      %vm1037 = vcmask 130048
      %v1038 = vsel %vm1037, %v1033, -inf
      %1039 = vmax.xlane.f32.xlu0 %v1038
      %v1040 = vpop.xlane.xlu0 %1039
      %v1041 = vsel %vm1037, %v1034, -inf
      %1042 = vmax.xlane.f32.xlu0 %v1041
      %v1043 = vpop.xlane.xlu0 %1042
      %v1044 = vsel %vm1037, %v1035, -inf
      %1045 = vmax.xlane.f32.xlu0 %v1044
      %v1046 = vpop.xlane.xlu0 %1045
      %v1047 = vsel %vm1037, %v1036, -inf
      %1048 = vmax.xlane.f32.xlu0 %v1047
      %v1049 = vpop.xlane.xlu0 %1048
      %v1050 = vsub.f32 %v1033, %v1040
      %v1051 = vsub.f32 %v1034, %v1043
      %v1052 = vsub.f32 %v1035, %v1046
      %v1053 = vsub.f32 %v1036, %v1049
      %v1054 = vmul.f32 %v1050, 1.442695
      %v1055 = vpow.pop %v1054
      %v1056 = vmul.f32 %v1051, 1.442695
      %v1057 = vpow.pop %v1056
      %v1058 = vmul.f32 %v1052, 1.442695
      %v1059 = vpow.pop %v1058
      %v1060 = vmul.f32 %v1053, 1.442695
      %v1061 = vpow.pop %v1060
      %v1062 = vsel %vm1037, %v1055, 0.0
      %1063 = vadd.xlane.f32.xlu0 %v1062
      %v1064 = vpop.xlane.xlu0 %1063
      %v1065 = vsel %vm1037, %v1057, 0.0
      %1066 = vadd.xlane.f32.xlu0 %v1065
      %v1067 = vpop.xlane.xlu0 %1066
      %v1068 = vsel %vm1037, %v1059, 0.0
      %1069 = vadd.xlane.f32.xlu0 %v1068
      %v1070 = vpop.xlane.xlu0 %1069
      %v1071 = vsel %vm1037, %v1061, 0.0
      %1072 = vadd.xlane.f32.xlu0 %v1071
      %v1073 = vpop.xlane.xlu0 %1072
      %v1074 = vrcp.pop %v1064
      %v1075 = vrcp.pop %v1067
      %v1076 = vrcp.pop %v1070
      %v1077 = vrcp.pop %v1073
      %v1078 = vmul.f32 %v1055, %v1074
      %v1079 = vmul.f32 %v1057, %v1075
      %v1080 = vmul.f32 %v1059, %v1076
      %v1081 = vmul.f32 %v1061, %v1077
      %v1082 = vpack.c.bf16 %v1079, %v1078
      %v1083 = vpack.c.bf16 %v1081, %v1080
      %1084 = vrot.lane.b32.xlu0 %v930, 64
      %v1085 = vpop.permute.xlu0 %1084
      %v1088 = vsel %vm1037, %v1082, 0
      %1090 = vmatprep.subr.bf16.mxu0 0
      %1091 = vmatpush1.bf16.msra.mxu0 0
      %1092 = vmatprep.subr.bf16.mxu0 0
      %1093 = vmatpush1.bf16.msra.mxu0 0
      %1094 = vmatprep.subr.bf16.mxu0 0
      %1095 = vmatpush1.bf16.msra.mxu0 0
      %1096 = vmatprep.subr.bf16.mxu0 0
      %1097 = vmatpush1.bf16.msra.mxu0 0
      %1098 = vmatprep.subr.bf16.mxu0 0
      %1099 = vmatpush1.bf16.msra.mxu0 0
      %1100 = vmatprep.subr.bf16.mxu0 0
      %1101 = vmatpush1.bf16.msra.mxu0 0
      %1102 = vmatprep.subr.bf16.mxu0 0
      %1103 = vmatpush1.bf16.msra.mxu0 0
      %1104 = vmatprep.subr.bf16.mxu0 0
      %1105 = vmatpush1.bf16.msra.mxu0 %v1085
      %1106 = vmatprep.subr.bf16.mxu0 0
      %1107 = vmatpush2.bf16.msra.mxu0 0
      %1108 = vmatprep.subr.bf16.mxu0 0
      %1109 = vmatpush2.bf16.msra.mxu0 0
      %1110 = vmatprep.subr.bf16.mxu0 0
      %1111 = vmatpush2.bf16.msra.mxu0 0
      %1112 = vmatprep.subr.bf16.mxu0 0
      %1113 = vmatpush2.bf16.msra.mxu0 0
      %1114 = vmatprep.subr.bf16.mxu0 0
      %1115 = vmatpush2.bf16.msra.mxu0 0
      %1116 = vmatprep.subr.bf16.mxu0 0
      %1117 = vmatpush2.bf16.msra.mxu0 0
      %1118 = vmatprep.subr.bf16.mxu0 0
      %1119 = vmatpush2.bf16.msra.mxu0 0
      %1120 = vmatprep.subr.bf16.mxu0 0
      %1121 = vmatpush2.bf16.msra.mxu0 0
      %1122 = vmatprep.mubr.bf16.mxu0 0
      %1123 = vmatmul.mubr.bf16.gmra.mxu0 %v1088
      %v1124 = vpop.f32.mrf.mxu0
      %v1125 = vadd.f32 0.0, %v1124
      %v1126 = vpop.f32.mrf.mxu0
      %v1127 = vpop.f32.mrf.mxu0
      %v1128 = vadd.f32 0.0, %v1127
      %v1129 = vpop.f32.mrf.mxu0
      %1130 = vdwg.mxu0
      %1131 = vrot.lane.b32.xlu0 %v931, 64
      %v1132 = vpop.permute.xlu0 %1131
      %v1135 = vsel %vm1037, %v1083, 0
      %1137 = vmatprep.subr.bf16.mxu0 0
      %1138 = vmatpush1.bf16.msra.mxu0 0
      %1139 = vmatprep.subr.bf16.mxu0 0
      %1140 = vmatpush1.bf16.msra.mxu0 0
      %1141 = vmatprep.subr.bf16.mxu0 0
      %1142 = vmatpush1.bf16.msra.mxu0 0
      %1143 = vmatprep.subr.bf16.mxu0 0
      %1144 = vmatpush1.bf16.msra.mxu0 0
      %1145 = vmatprep.subr.bf16.mxu0 0
      %1146 = vmatpush1.bf16.msra.mxu0 0
      %1147 = vmatprep.subr.bf16.mxu0 0
      %1148 = vmatpush1.bf16.msra.mxu0 0
      %1149 = vmatprep.subr.bf16.mxu0 0
      %1150 = vmatpush1.bf16.msra.mxu0 0
      %1151 = vmatprep.subr.bf16.mxu0 0
      %1152 = vmatpush1.bf16.msra.mxu0 %v1132
      %1153 = vmatprep.subr.bf16.mxu0 0
      %1154 = vmatpush2.bf16.msra.mxu0 0
      %1155 = vmatprep.subr.bf16.mxu0 0
      %1156 = vmatpush2.bf16.msra.mxu0 0
      %1157 = vmatprep.subr.bf16.mxu0 0
      %1158 = vmatpush2.bf16.msra.mxu0 0
      %1159 = vmatprep.subr.bf16.mxu0 0
      %1160 = vmatpush2.bf16.msra.mxu0 0
      %1161 = vmatprep.subr.bf16.mxu0 0
      %1162 = vmatpush2.bf16.msra.mxu0 0
      %1163 = vmatprep.subr.bf16.mxu0 0
      %1164 = vmatpush2.bf16.msra.mxu0 0
      %1165 = vmatprep.subr.bf16.mxu0 0
      %1166 = vmatpush2.bf16.msra.mxu0 0
      %1167 = vmatprep.subr.bf16.mxu0 0
      %1168 = vmatpush2.bf16.msra.mxu0 0
      %1169 = vmatprep.mubr.bf16.mxu0 0
      %1170 = vmatmul.mubr.bf16.gmra.mxu0 %v1135
      %v1171 = vpop.f32.mrf.mxu0
      %v1172 = vadd.f32 0.0, %v1171
      %v1173 = vpop.f32.mrf.mxu0
      %v1174 = vpop.f32.mrf.mxu0
      %v1175 = vadd.f32 0.0, %v1174
      %v1176 = vpop.f32.mrf.mxu0
      %1177 = vdwg.mxu0
      %1178 = vrot.lane.b32.xlu0 %v930, 120
      %v1179 = vpop.permute.xlu0 %1178
      %1180 = vrot.lane.b32.xlu0 %v930, 88
      %v1181 = vpop.permute.xlu0 %1180
      %v1183 = vsel %vm935, %v1179, 0
      %v1186 = vsel %vm935, %v1181, 0
      %1188 = vmatprep.subr.bf16.mxu0 0
      %1189 = vmatpush1.bf16.xpose.msra.mxu0 0
      %1190 = vmatprep.subr.bf16.mxu0 0
      %1191 = vmatpush1.bf16.xpose.msra.mxu0 0
      %1192 = vmatprep.subr.bf16.mxu0 0
      %1193 = vmatpush1.bf16.xpose.msra.mxu0 0
      %1194 = vmatprep.subr.bf16.mxu0 0
      %1195 = vmatpush1.bf16.xpose.msra.mxu0 0
      %1196 = vmatprep.subr.bf16.mxu0 0
      %1197 = vmatpush1.bf16.xpose.msra.mxu0 0
      %1198 = vmatprep.subr.bf16.mxu0 0
      %1199 = vmatpush1.bf16.xpose.msra.mxu0 0
      %1200 = vmatprep.subr.bf16.mxu0 0
      %1201 = vmatpush1.bf16.xpose.msra.mxu0 0
      %1202 = vmatprep.subr.bf16.mxu0 0
      %1203 = vmatpush1.bf16.xpose.msra.mxu0 %v1186
      %1204 = vmatprep.subr.bf16.mxu0 0
      %1205 = vmatpush2.bf16.xpose.msra.mxu0 0
      %1206 = vmatprep.subr.bf16.mxu0 0
      %1207 = vmatpush2.bf16.xpose.msra.mxu0 0
      %1208 = vmatprep.subr.bf16.mxu0 0
      %1209 = vmatpush2.bf16.xpose.msra.mxu0 0
      %1210 = vmatprep.subr.bf16.mxu0 0
      %1211 = vmatpush2.bf16.xpose.msra.mxu0 0
      %1212 = vmatprep.subr.bf16.mxu0 0
      %1213 = vmatpush2.bf16.xpose.msra.mxu0 0
      %1214 = vmatprep.subr.bf16.mxu0 0
      %1215 = vmatpush2.bf16.xpose.msra.mxu0 0
      %1216 = vmatprep.subr.bf16.mxu0 0
      %1217 = vmatpush2.bf16.xpose.msra.mxu0 0
      %1218 = vmatprep.subr.bf16.mxu0 0
      %1219 = vmatpush2.bf16.xpose.msra.mxu0 0
      %1220 = vmatprep.mubr.bf16.mxu0 0
      %1221 = vmatmul.mubr.bf16.gmra.mxu0 %v1183
      %v1222 = vpop.f32.mrf.mxu0
      %v1223 = vadd.f32 0.0, %v1222
      %v1224 = vpop.f32.mrf.mxu0
      %v1225 = vpop.f32.mrf.mxu0
      %v1226 = vadd.f32 0.0, %v1225
      %v1227 = vpop.f32.mrf.mxu0
      %1228 = vdwg.mxu0
      %1229 = vrot.lane.b32.xlu0 %v931, 120
      %v1230 = vpop.permute.xlu0 %1229
      %1231 = vrot.lane.b32.xlu0 %v931, 88
      %v1232 = vpop.permute.xlu0 %1231
      %v1234 = vsel %vm935, %v1230, 0
      %v1237 = vsel %vm935, %v1232, 0
      %1239 = vmatprep.subr.bf16.mxu0 0
      %1240 = vmatpush1.bf16.xpose.msra.mxu0 0
      %1241 = vmatprep.subr.bf16.mxu0 0
      %1242 = vmatpush1.bf16.xpose.msra.mxu0 0
      %1243 = vmatprep.subr.bf16.mxu0 0
      %1244 = vmatpush1.bf16.xpose.msra.mxu0 0
      %1245 = vmatprep.subr.bf16.mxu0 0
      %1246 = vmatpush1.bf16.xpose.msra.mxu0 0
      %1247 = vmatprep.subr.bf16.mxu0 0
      %1248 = vmatpush1.bf16.xpose.msra.mxu0 0
      %1249 = vmatprep.subr.bf16.mxu0 0
      %1250 = vmatpush1.bf16.xpose.msra.mxu0 0
      %1251 = vmatprep.subr.bf16.mxu0 0
      %1252 = vmatpush1.bf16.xpose.msra.mxu0 0
      %1253 = vmatprep.subr.bf16.mxu0 0
      %1254 = vmatpush1.bf16.xpose.msra.mxu0 %v1237
      %1255 = vmatprep.subr.bf16.mxu0 0
      %1256 = vmatpush2.bf16.xpose.msra.mxu0 0
      %1257 = vmatprep.subr.bf16.mxu0 0
      %1258 = vmatpush2.bf16.xpose.msra.mxu0 0
      %1259 = vmatprep.subr.bf16.mxu0 0
      %1260 = vmatpush2.bf16.xpose.msra.mxu0 0
      %1261 = vmatprep.subr.bf16.mxu0 0
      %1262 = vmatpush2.bf16.xpose.msra.mxu0 0
      %1263 = vmatprep.subr.bf16.mxu0 0
      %1264 = vmatpush2.bf16.xpose.msra.mxu0 0
      %1265 = vmatprep.subr.bf16.mxu0 0
      %1266 = vmatpush2.bf16.xpose.msra.mxu0 0
      %1267 = vmatprep.subr.bf16.mxu0 0
      %1268 = vmatpush2.bf16.xpose.msra.mxu0 0
      %1269 = vmatprep.subr.bf16.mxu0 0
      %1270 = vmatpush2.bf16.xpose.msra.mxu0 0
      %1271 = vmatprep.mubr.bf16.mxu0 0
      %1272 = vmatmul.mubr.bf16.gmra.mxu0 %v1234
      %v1273 = vpop.f32.mrf.mxu0
      %v1274 = vadd.f32 0.0, %v1273
      %v1275 = vpop.f32.mrf.mxu0
      %v1276 = vpop.f32.mrf.mxu0
      %v1277 = vadd.f32 0.0, %v1276
      %v1278 = vpop.f32.mrf.mxu0
      %1279 = vdwg.mxu0
      %v1280 = vmul.f32 %v1223, 0.35355338
      %v1281 = vmul.f32 %v1226, 0.35355338
      %v1282 = vmul.f32 %v1274, 0.35355338
      %v1283 = vmul.f32 %v1277, 0.35355338
      %v1284 = vsel %vm1037, %v1280, -inf
      %1285 = vmax.xlane.f32.xlu0 %v1284
      %v1286 = vpop.xlane.xlu0 %1285
      %v1287 = vsel %vm1037, %v1281, -inf
      %1288 = vmax.xlane.f32.xlu0 %v1287
      %v1289 = vpop.xlane.xlu0 %1288
      %v1290 = vsel %vm1037, %v1282, -inf
      %1291 = vmax.xlane.f32.xlu0 %v1290
      %v1292 = vpop.xlane.xlu0 %1291
      %v1293 = vsel %vm1037, %v1283, -inf
      %1294 = vmax.xlane.f32.xlu0 %v1293
      %v1295 = vpop.xlane.xlu0 %1294
      %v1296 = vsub.f32 %v1280, %v1286
      %v1297 = vsub.f32 %v1281, %v1289
      %v1298 = vsub.f32 %v1282, %v1292
      %v1299 = vsub.f32 %v1283, %v1295
      %v1300 = vmul.f32 %v1296, 1.442695
      %v1301 = vpow.pop %v1300
      %v1302 = vmul.f32 %v1297, 1.442695
      %v1303 = vpow.pop %v1302
      %v1304 = vmul.f32 %v1298, 1.442695
      %v1305 = vpow.pop %v1304
      %v1306 = vmul.f32 %v1299, 1.442695
      %v1307 = vpow.pop %v1306
      %v1308 = vsel %vm1037, %v1301, 0.0
      %1309 = vadd.xlane.f32.xlu0 %v1308
      %v1310 = vpop.xlane.xlu0 %1309
      %v1311 = vsel %vm1037, %v1303, 0.0
      %1312 = vadd.xlane.f32.xlu0 %v1311
      %v1313 = vpop.xlane.xlu0 %1312
      %v1314 = vsel %vm1037, %v1305, 0.0
      %1315 = vadd.xlane.f32.xlu0 %v1314
      %v1316 = vpop.xlane.xlu0 %1315
      %v1317 = vsel %vm1037, %v1307, 0.0
      %1318 = vadd.xlane.f32.xlu0 %v1317
      %v1319 = vpop.xlane.xlu0 %1318
      %v1320 = vrcp.pop %v1310
      %v1321 = vrcp.pop %v1313
      %v1322 = vrcp.pop %v1316
      %v1323 = vrcp.pop %v1319
      %v1324 = vmul.f32 %v1301, %v1320
      %v1325 = vmul.f32 %v1303, %v1321
      %v1326 = vmul.f32 %v1305, %v1322
      %v1327 = vmul.f32 %v1307, %v1323
      %v1328 = vpack.c.bf16 %v1325, %v1324
      %v1329 = vpack.c.bf16 %v1327, %v1326
      %1330 = vrot.lane.b32.xlu0 %v930, 56
      %v1331 = vpop.permute.xlu0 %1330
      %v1334 = vsel %vm1037, %v1328, 0
      %1336 = vmatprep.subr.bf16.mxu0 0
      %1337 = vmatpush1.bf16.msra.mxu0 0
      %1338 = vmatprep.subr.bf16.mxu0 0
      %1339 = vmatpush1.bf16.msra.mxu0 0
      %1340 = vmatprep.subr.bf16.mxu0 0
      %1341 = vmatpush1.bf16.msra.mxu0 0
      %1342 = vmatprep.subr.bf16.mxu0 0
      %1343 = vmatpush1.bf16.msra.mxu0 0
      %1344 = vmatprep.subr.bf16.mxu0 0
      %1345 = vmatpush1.bf16.msra.mxu0 0
      %1346 = vmatprep.subr.bf16.mxu0 0
      %1347 = vmatpush1.bf16.msra.mxu0 0
      %1348 = vmatprep.subr.bf16.mxu0 0
      %1349 = vmatpush1.bf16.msra.mxu0 0
      %1350 = vmatprep.subr.bf16.mxu0 0
      %1351 = vmatpush1.bf16.msra.mxu0 %v1331
      %1352 = vmatprep.subr.bf16.mxu0 0
      %1353 = vmatpush2.bf16.msra.mxu0 0
      %1354 = vmatprep.subr.bf16.mxu0 0
      %1355 = vmatpush2.bf16.msra.mxu0 0
      %1356 = vmatprep.subr.bf16.mxu0 0
      %1357 = vmatpush2.bf16.msra.mxu0 0
      %1358 = vmatprep.subr.bf16.mxu0 0
      %1359 = vmatpush2.bf16.msra.mxu0 0
      %1360 = vmatprep.subr.bf16.mxu0 0
      %1361 = vmatpush2.bf16.msra.mxu0 0
      %1362 = vmatprep.subr.bf16.mxu0 0
      %1363 = vmatpush2.bf16.msra.mxu0 0
      %1364 = vmatprep.subr.bf16.mxu0 0
      %1365 = vmatpush2.bf16.msra.mxu0 0
      %1366 = vmatprep.subr.bf16.mxu0 0
      %1367 = vmatpush2.bf16.msra.mxu0 0
      %1368 = vmatprep.mubr.bf16.mxu0 0
      %1369 = vmatmul.mubr.bf16.gmra.mxu0 %v1334
      %v1370 = vpop.f32.mrf.mxu0
      %v1371 = vadd.f32 0.0, %v1370
      %v1372 = vpop.f32.mrf.mxu0
      %v1373 = vpop.f32.mrf.mxu0
      %v1374 = vadd.f32 0.0, %v1373
      %v1375 = vpop.f32.mrf.mxu0
      %1376 = vdwg.mxu0
      %1377 = vrot.lane.b32.xlu0 %v931, 56
      %v1378 = vpop.permute.xlu0 %1377
      %v1381 = vsel %vm1037, %v1329, 0
      %1383 = vmatprep.subr.bf16.mxu0 0
      %1384 = vmatpush1.bf16.msra.mxu0 0
      %1385 = vmatprep.subr.bf16.mxu0 0
      %1386 = vmatpush1.bf16.msra.mxu0 0
      %1387 = vmatprep.subr.bf16.mxu0 0
      %1388 = vmatpush1.bf16.msra.mxu0 0
      %1389 = vmatprep.subr.bf16.mxu0 0
      %1390 = vmatpush1.bf16.msra.mxu0 0
      %1391 = vmatprep.subr.bf16.mxu0 0
      %1392 = vmatpush1.bf16.msra.mxu0 0
      %1393 = vmatprep.subr.bf16.mxu0 0
      %1394 = vmatpush1.bf16.msra.mxu0 0
      %1395 = vmatprep.subr.bf16.mxu0 0
      %1396 = vmatpush1.bf16.msra.mxu0 0
      %1397 = vmatprep.subr.bf16.mxu0 0
      %1398 = vmatpush1.bf16.msra.mxu0 %v1378
      %1399 = vmatprep.subr.bf16.mxu0 0
      %1400 = vmatpush2.bf16.msra.mxu0 0
      %1401 = vmatprep.subr.bf16.mxu0 0
      %1402 = vmatpush2.bf16.msra.mxu0 0
      %1403 = vmatprep.subr.bf16.mxu0 0
      %1404 = vmatpush2.bf16.msra.mxu0 0
      %1405 = vmatprep.subr.bf16.mxu0 0
      %1406 = vmatpush2.bf16.msra.mxu0 0
      %1407 = vmatprep.subr.bf16.mxu0 0
      %1408 = vmatpush2.bf16.msra.mxu0 0
      %1409 = vmatprep.subr.bf16.mxu0 0
      %1410 = vmatpush2.bf16.msra.mxu0 0
      %1411 = vmatprep.subr.bf16.mxu0 0
      %1412 = vmatpush2.bf16.msra.mxu0 0
      %1413 = vmatprep.subr.bf16.mxu0 0
      %1414 = vmatpush2.bf16.msra.mxu0 0
      %1415 = vmatprep.mubr.bf16.mxu0 0
      %1416 = vmatmul.mubr.bf16.gmra.mxu0 %v1381
      %v1417 = vpop.f32.mrf.mxu0
      %v1418 = vadd.f32 0.0, %v1417
      %v1419 = vpop.f32.mrf.mxu0
      %v1420 = vpop.f32.mrf.mxu0
      %v1421 = vadd.f32 0.0, %v1420
      %v1422 = vpop.f32.mrf.mxu0
      %1423 = vdwg.mxu0
      %1424 = vrot.lane.b32.xlu0 %v930, 112
      %v1425 = vpop.permute.xlu0 %1424
      %1426 = vrot.lane.b32.xlu0 %v930, 80
      %v1427 = vpop.permute.xlu0 %1426
      %v1429 = vsel %vm935, %v1425, 0
      %v1432 = vsel %vm935, %v1427, 0
      %1434 = vmatprep.subr.bf16.mxu0 0
      %1435 = vmatpush1.bf16.xpose.msra.mxu0 0
      %1436 = vmatprep.subr.bf16.mxu0 0
      %1437 = vmatpush1.bf16.xpose.msra.mxu0 0
      %1438 = vmatprep.subr.bf16.mxu0 0
      %1439 = vmatpush1.bf16.xpose.msra.mxu0 0
      %1440 = vmatprep.subr.bf16.mxu0 0
      %1441 = vmatpush1.bf16.xpose.msra.mxu0 0
      %1442 = vmatprep.subr.bf16.mxu0 0
      %1443 = vmatpush1.bf16.xpose.msra.mxu0 0
      %1444 = vmatprep.subr.bf16.mxu0 0
      %1445 = vmatpush1.bf16.xpose.msra.mxu0 0
      %1446 = vmatprep.subr.bf16.mxu0 0
      %1447 = vmatpush1.bf16.xpose.msra.mxu0 0
      %1448 = vmatprep.subr.bf16.mxu0 0
      %1449 = vmatpush1.bf16.xpose.msra.mxu0 %v1432
      %1450 = vmatprep.subr.bf16.mxu0 0
      %1451 = vmatpush2.bf16.xpose.msra.mxu0 0
      %1452 = vmatprep.subr.bf16.mxu0 0
      %1453 = vmatpush2.bf16.xpose.msra.mxu0 0
      %1454 = vmatprep.subr.bf16.mxu0 0
      %1455 = vmatpush2.bf16.xpose.msra.mxu0 0
      %1456 = vmatprep.subr.bf16.mxu0 0
      %1457 = vmatpush2.bf16.xpose.msra.mxu0 0
      %1458 = vmatprep.subr.bf16.mxu0 0
      %1459 = vmatpush2.bf16.xpose.msra.mxu0 0
      %1460 = vmatprep.subr.bf16.mxu0 0
      %1461 = vmatpush2.bf16.xpose.msra.mxu0 0
      %1462 = vmatprep.subr.bf16.mxu0 0
      %1463 = vmatpush2.bf16.xpose.msra.mxu0 0
      %1464 = vmatprep.subr.bf16.mxu0 0
      %1465 = vmatpush2.bf16.xpose.msra.mxu0 0
      %1466 = vmatprep.mubr.bf16.mxu0 0
      %1467 = vmatmul.mubr.bf16.gmra.mxu0 %v1429
      %v1468 = vpop.f32.mrf.mxu0
      %v1469 = vadd.f32 0.0, %v1468
      %v1470 = vpop.f32.mrf.mxu0
      %v1471 = vpop.f32.mrf.mxu0
      %v1472 = vadd.f32 0.0, %v1471
      %v1473 = vpop.f32.mrf.mxu0
      %1474 = vdwg.mxu0
      %1475 = vrot.lane.b32.xlu0 %v931, 112
      %v1476 = vpop.permute.xlu0 %1475
      %1477 = vrot.lane.b32.xlu0 %v931, 80
      %v1478 = vpop.permute.xlu0 %1477
      %v1480 = vsel %vm935, %v1476, 0
      %v1483 = vsel %vm935, %v1478, 0
      %1485 = vmatprep.subr.bf16.mxu0 0
      %1486 = vmatpush1.bf16.xpose.msra.mxu0 0
      %1487 = vmatprep.subr.bf16.mxu0 0
      %1488 = vmatpush1.bf16.xpose.msra.mxu0 0
      %1489 = vmatprep.subr.bf16.mxu0 0
      %1490 = vmatpush1.bf16.xpose.msra.mxu0 0
      %1491 = vmatprep.subr.bf16.mxu0 0
      %1492 = vmatpush1.bf16.xpose.msra.mxu0 0
      %1493 = vmatprep.subr.bf16.mxu0 0
      %1494 = vmatpush1.bf16.xpose.msra.mxu0 0
      %1495 = vmatprep.subr.bf16.mxu0 0
      %1496 = vmatpush1.bf16.xpose.msra.mxu0 0
      %1497 = vmatprep.subr.bf16.mxu0 0
      %1498 = vmatpush1.bf16.xpose.msra.mxu0 0
      %1499 = vmatprep.subr.bf16.mxu0 0
      %1500 = vmatpush1.bf16.xpose.msra.mxu0 %v1483
      %1501 = vmatprep.subr.bf16.mxu0 0
      %1502 = vmatpush2.bf16.xpose.msra.mxu0 0
      %1503 = vmatprep.subr.bf16.mxu0 0
      %1504 = vmatpush2.bf16.xpose.msra.mxu0 0
      %1505 = vmatprep.subr.bf16.mxu0 0
      %1506 = vmatpush2.bf16.xpose.msra.mxu0 0
      %1507 = vmatprep.subr.bf16.mxu0 0
      %1508 = vmatpush2.bf16.xpose.msra.mxu0 0
      %1509 = vmatprep.subr.bf16.mxu0 0
      %1510 = vmatpush2.bf16.xpose.msra.mxu0 0
      %1511 = vmatprep.subr.bf16.mxu0 0
      %1512 = vmatpush2.bf16.xpose.msra.mxu0 0
      %1513 = vmatprep.subr.bf16.mxu0 0
      %1514 = vmatpush2.bf16.xpose.msra.mxu0 0
      %1515 = vmatprep.subr.bf16.mxu0 0
      %1516 = vmatpush2.bf16.xpose.msra.mxu0 0
      %1517 = vmatprep.mubr.bf16.mxu0 0
      %1518 = vmatmul.mubr.bf16.gmra.mxu0 %v1480
      %v1519 = vpop.f32.mrf.mxu0
      %v1520 = vadd.f32 0.0, %v1519
      %v1521 = vpop.f32.mrf.mxu0
      %v1522 = vpop.f32.mrf.mxu0
      %v1523 = vadd.f32 0.0, %v1522
      %v1524 = vpop.f32.mrf.mxu0
      %1525 = vdwg.mxu0
      %v1526 = vmul.f32 %v1469, 0.35355338
      %v1527 = vmul.f32 %v1472, 0.35355338
      %v1528 = vmul.f32 %v1520, 0.35355338
      %v1529 = vmul.f32 %v1523, 0.35355338
      %v1530 = vsel %vm1037, %v1526, -inf
      %1531 = vmax.xlane.f32.xlu0 %v1530
      %v1532 = vpop.xlane.xlu0 %1531
      %v1533 = vsel %vm1037, %v1527, -inf
      %1534 = vmax.xlane.f32.xlu0 %v1533
      %v1535 = vpop.xlane.xlu0 %1534
      %v1536 = vsel %vm1037, %v1528, -inf
      %1537 = vmax.xlane.f32.xlu0 %v1536
      %v1538 = vpop.xlane.xlu0 %1537
      %v1539 = vsel %vm1037, %v1529, -inf
      %1540 = vmax.xlane.f32.xlu0 %v1539
      %v1541 = vpop.xlane.xlu0 %1540
      %v1542 = vsub.f32 %v1526, %v1532
      %v1543 = vsub.f32 %v1527, %v1535
      %v1544 = vsub.f32 %v1528, %v1538
      %v1545 = vsub.f32 %v1529, %v1541
      %v1546 = vmul.f32 %v1542, 1.442695
      %v1547 = vpow.pop %v1546
      %v1548 = vmul.f32 %v1543, 1.442695
      %v1549 = vpow.pop %v1548
      %v1550 = vmul.f32 %v1544, 1.442695
      %v1551 = vpow.pop %v1550
      %v1552 = vmul.f32 %v1545, 1.442695
      %v1553 = vpow.pop %v1552
      %v1554 = vsel %vm1037, %v1547, 0.0
      %1555 = vadd.xlane.f32.xlu0 %v1554
      %v1556 = vpop.xlane.xlu0 %1555
      %v1557 = vsel %vm1037, %v1549, 0.0
      %1558 = vadd.xlane.f32.xlu0 %v1557
      %v1559 = vpop.xlane.xlu0 %1558
      %v1560 = vsel %vm1037, %v1551, 0.0
      %1561 = vadd.xlane.f32.xlu0 %v1560
      %v1562 = vpop.xlane.xlu0 %1561
      %v1563 = vsel %vm1037, %v1553, 0.0
      %1564 = vadd.xlane.f32.xlu0 %v1563
      %v1565 = vpop.xlane.xlu0 %1564
      %v1566 = vrcp.pop %v1556
      %v1567 = vrcp.pop %v1559
      %v1568 = vrcp.pop %v1562
      %v1569 = vrcp.pop %v1565
      %v1570 = vmul.f32 %v1547, %v1566
      %v1571 = vmul.f32 %v1549, %v1567
      %v1572 = vmul.f32 %v1551, %v1568
      %v1573 = vmul.f32 %v1553, %v1569
      %v1574 = vpack.c.bf16 %v1571, %v1570
      %v1575 = vpack.c.bf16 %v1573, %v1572
      %1576 = vrot.lane.b32.xlu0 %v930, 48
      %v1577 = vpop.permute.xlu0 %1576
      %v1580 = vsel %vm1037, %v1574, 0
      %1582 = vmatprep.subr.bf16.mxu0 0
      %1583 = vmatpush1.bf16.msra.mxu0 0
      %1584 = vmatprep.subr.bf16.mxu0 0
      %1585 = vmatpush1.bf16.msra.mxu0 0
      %1586 = vmatprep.subr.bf16.mxu0 0
      %1587 = vmatpush1.bf16.msra.mxu0 0
      %1588 = vmatprep.subr.bf16.mxu0 0
      %1589 = vmatpush1.bf16.msra.mxu0 0
      %1590 = vmatprep.subr.bf16.mxu0 0
      %1591 = vmatpush1.bf16.msra.mxu0 0
      %1592 = vmatprep.subr.bf16.mxu0 0
      %1593 = vmatpush1.bf16.msra.mxu0 0
      %1594 = vmatprep.subr.bf16.mxu0 0
      %1595 = vmatpush1.bf16.msra.mxu0 0
      %1596 = vmatprep.subr.bf16.mxu0 0
      %1597 = vmatpush1.bf16.msra.mxu0 %v1577
      %1598 = vmatprep.subr.bf16.mxu0 0
      %1599 = vmatpush2.bf16.msra.mxu0 0
      %1600 = vmatprep.subr.bf16.mxu0 0
      %1601 = vmatpush2.bf16.msra.mxu0 0
      %1602 = vmatprep.subr.bf16.mxu0 0
      %1603 = vmatpush2.bf16.msra.mxu0 0
      %1604 = vmatprep.subr.bf16.mxu0 0
      %1605 = vmatpush2.bf16.msra.mxu0 0
      %1606 = vmatprep.subr.bf16.mxu0 0
      %1607 = vmatpush2.bf16.msra.mxu0 0
      %1608 = vmatprep.subr.bf16.mxu0 0
      %1609 = vmatpush2.bf16.msra.mxu0 0
      %1610 = vmatprep.subr.bf16.mxu0 0
      %1611 = vmatpush2.bf16.msra.mxu0 0
      %1612 = vmatprep.subr.bf16.mxu0 0
      %1613 = vmatpush2.bf16.msra.mxu0 0
      %1614 = vmatprep.mubr.bf16.mxu0 0
      %1615 = vmatmul.mubr.bf16.gmra.mxu0 %v1580
      %v1616 = vpop.f32.mrf.mxu0
      %v1617 = vadd.f32 0.0, %v1616
      %v1618 = vpop.f32.mrf.mxu0
      %v1619 = vpop.f32.mrf.mxu0
      %v1620 = vadd.f32 0.0, %v1619
      %v1621 = vpop.f32.mrf.mxu0
      %1622 = vdwg.mxu0
      %1623 = vrot.lane.b32.xlu0 %v931, 48
      %v1624 = vpop.permute.xlu0 %1623
      %v1627 = vsel %vm1037, %v1575, 0
      %1629 = vmatprep.subr.bf16.mxu0 0
      %1630 = vmatpush1.bf16.msra.mxu0 0
      %1631 = vmatprep.subr.bf16.mxu0 0
      %1632 = vmatpush1.bf16.msra.mxu0 0
      %1633 = vmatprep.subr.bf16.mxu0 0
      %1634 = vmatpush1.bf16.msra.mxu0 0
      %1635 = vmatprep.subr.bf16.mxu0 0
      %1636 = vmatpush1.bf16.msra.mxu0 0
      %1637 = vmatprep.subr.bf16.mxu0 0
      %1638 = vmatpush1.bf16.msra.mxu0 0
      %1639 = vmatprep.subr.bf16.mxu0 0
      %1640 = vmatpush1.bf16.msra.mxu0 0
      %1641 = vmatprep.subr.bf16.mxu0 0
      %1642 = vmatpush1.bf16.msra.mxu0 0
      %1643 = vmatprep.subr.bf16.mxu0 0
      %1644 = vmatpush1.bf16.msra.mxu0 %v1624
      %1645 = vmatprep.subr.bf16.mxu0 0
      %1646 = vmatpush2.bf16.msra.mxu0 0
      %1647 = vmatprep.subr.bf16.mxu0 0
      %1648 = vmatpush2.bf16.msra.mxu0 0
      %1649 = vmatprep.subr.bf16.mxu0 0
      %1650 = vmatpush2.bf16.msra.mxu0 0
      %1651 = vmatprep.subr.bf16.mxu0 0
      %1652 = vmatpush2.bf16.msra.mxu0 0
      %1653 = vmatprep.subr.bf16.mxu0 0
      %1654 = vmatpush2.bf16.msra.mxu0 0
      %1655 = vmatprep.subr.bf16.mxu0 0
      %1656 = vmatpush2.bf16.msra.mxu0 0
      %1657 = vmatprep.subr.bf16.mxu0 0
      %1658 = vmatpush2.bf16.msra.mxu0 0
      %1659 = vmatprep.subr.bf16.mxu0 0
      %1660 = vmatpush2.bf16.msra.mxu0 0
      %1661 = vmatprep.mubr.bf16.mxu0 0
      %1662 = vmatmul.mubr.bf16.gmra.mxu0 %v1627
      %v1663 = vpop.f32.mrf.mxu0
      %v1664 = vadd.f32 0.0, %v1663
      %v1665 = vpop.f32.mrf.mxu0
      %v1666 = vpop.f32.mrf.mxu0
      %v1667 = vadd.f32 0.0, %v1666
      %v1668 = vpop.f32.mrf.mxu0
      %1669 = vdwg.mxu0
      %1670 = vrot.lane.b32.xlu0 %v930, 104
      %v1671 = vpop.permute.xlu0 %1670
      %1672 = vrot.lane.b32.xlu0 %v930, 72
      %v1673 = vpop.permute.xlu0 %1672
      %v1675 = vsel %vm935, %v1671, 0
      %v1678 = vsel %vm935, %v1673, 0
      %1680 = vmatprep.subr.bf16.mxu0 0
      %1681 = vmatpush1.bf16.xpose.msra.mxu0 0
      %1682 = vmatprep.subr.bf16.mxu0 0
      %1683 = vmatpush1.bf16.xpose.msra.mxu0 0
      %1684 = vmatprep.subr.bf16.mxu0 0
      %1685 = vmatpush1.bf16.xpose.msra.mxu0 0
      %1686 = vmatprep.subr.bf16.mxu0 0
      %1687 = vmatpush1.bf16.xpose.msra.mxu0 0
      %1688 = vmatprep.subr.bf16.mxu0 0
      %1689 = vmatpush1.bf16.xpose.msra.mxu0 0
      %1690 = vmatprep.subr.bf16.mxu0 0
      %1691 = vmatpush1.bf16.xpose.msra.mxu0 0
      %1692 = vmatprep.subr.bf16.mxu0 0
      %1693 = vmatpush1.bf16.xpose.msra.mxu0 0
      %1694 = vmatprep.subr.bf16.mxu0 0
      %1695 = vmatpush1.bf16.xpose.msra.mxu0 %v1678
      %1696 = vmatprep.subr.bf16.mxu0 0
      %1697 = vmatpush2.bf16.xpose.msra.mxu0 0
      %1698 = vmatprep.subr.bf16.mxu0 0
      %1699 = vmatpush2.bf16.xpose.msra.mxu0 0
      %1700 = vmatprep.subr.bf16.mxu0 0
      %1701 = vmatpush2.bf16.xpose.msra.mxu0 0
      %1702 = vmatprep.subr.bf16.mxu0 0
      %1703 = vmatpush2.bf16.xpose.msra.mxu0 0
      %1704 = vmatprep.subr.bf16.mxu0 0
      %1705 = vmatpush2.bf16.xpose.msra.mxu0 0
      %1706 = vmatprep.subr.bf16.mxu0 0
      %1707 = vmatpush2.bf16.xpose.msra.mxu0 0
      %1708 = vmatprep.subr.bf16.mxu0 0
      %1709 = vmatpush2.bf16.xpose.msra.mxu0 0
      %1710 = vmatprep.subr.bf16.mxu0 0
      %1711 = vmatpush2.bf16.xpose.msra.mxu0 0
      %1712 = vmatprep.mubr.bf16.mxu0 0
      %1713 = vmatmul.mubr.bf16.gmra.mxu0 %v1675
      %v1714 = vpop.f32.mrf.mxu0
      %v1715 = vadd.f32 0.0, %v1714
      %v1716 = vpop.f32.mrf.mxu0
      %v1717 = vpop.f32.mrf.mxu0
      %v1718 = vadd.f32 0.0, %v1717
      %v1719 = vpop.f32.mrf.mxu0
      %1720 = vdwg.mxu0
      %1721 = vrot.lane.b32.xlu0 %v931, 104
      %v1722 = vpop.permute.xlu0 %1721
      %1723 = vrot.lane.b32.xlu0 %v931, 72
      %v1724 = vpop.permute.xlu0 %1723
      %v1726 = vsel %vm935, %v1722, 0
      %v1729 = vsel %vm935, %v1724, 0
      %1731 = vmatprep.subr.bf16.mxu0 0
      %1732 = vmatpush1.bf16.xpose.msra.mxu0 0
      %1733 = vmatprep.subr.bf16.mxu0 0
      %1734 = vmatpush1.bf16.xpose.msra.mxu0 0
      %1735 = vmatprep.subr.bf16.mxu0 0
      %1736 = vmatpush1.bf16.xpose.msra.mxu0 0
      %1737 = vmatprep.subr.bf16.mxu0 0
      %1738 = vmatpush1.bf16.xpose.msra.mxu0 0
      %1739 = vmatprep.subr.bf16.mxu0 0
      %1740 = vmatpush1.bf16.xpose.msra.mxu0 0
      %1741 = vmatprep.subr.bf16.mxu0 0
      %1742 = vmatpush1.bf16.xpose.msra.mxu0 0
      %1743 = vmatprep.subr.bf16.mxu0 0
      %1744 = vmatpush1.bf16.xpose.msra.mxu0 0
      %1745 = vmatprep.subr.bf16.mxu0 0
      %1746 = vmatpush1.bf16.xpose.msra.mxu0 %v1729
      %1747 = vmatprep.subr.bf16.mxu0 0
      %1748 = vmatpush2.bf16.xpose.msra.mxu0 0
      %1749 = vmatprep.subr.bf16.mxu0 0
      %1750 = vmatpush2.bf16.xpose.msra.mxu0 0
      %1751 = vmatprep.subr.bf16.mxu0 0
      %1752 = vmatpush2.bf16.xpose.msra.mxu0 0
      %1753 = vmatprep.subr.bf16.mxu0 0
      %1754 = vmatpush2.bf16.xpose.msra.mxu0 0
      %1755 = vmatprep.subr.bf16.mxu0 0
      %1756 = vmatpush2.bf16.xpose.msra.mxu0 0
      %1757 = vmatprep.subr.bf16.mxu0 0
      %1758 = vmatpush2.bf16.xpose.msra.mxu0 0
      %1759 = vmatprep.subr.bf16.mxu0 0
      %1760 = vmatpush2.bf16.xpose.msra.mxu0 0
      %1761 = vmatprep.subr.bf16.mxu0 0
      %1762 = vmatpush2.bf16.xpose.msra.mxu0 0
      %1763 = vmatprep.mubr.bf16.mxu0 0
      %1764 = vmatmul.mubr.bf16.gmra.mxu0 %v1726
      %v1765 = vpop.f32.mrf.mxu0
      %v1766 = vadd.f32 0.0, %v1765
      %v1767 = vpop.f32.mrf.mxu0
      %v1768 = vpop.f32.mrf.mxu0
      %v1769 = vadd.f32 0.0, %v1768
      %v1770 = vpop.f32.mrf.mxu0
      %1771 = vdwg.mxu0
      %v1772 = vmul.f32 %v1715, 0.35355338
      %v1773 = vmul.f32 %v1718, 0.35355338
      %v1774 = vmul.f32 %v1766, 0.35355338
      %v1775 = vmul.f32 %v1769, 0.35355338
      %v1776 = vsel %vm1037, %v1772, -inf
      %1777 = vmax.xlane.f32.xlu0 %v1776
      %v1778 = vpop.xlane.xlu0 %1777
      %v1779 = vsel %vm1037, %v1773, -inf
      %1780 = vmax.xlane.f32.xlu0 %v1779
      %v1781 = vpop.xlane.xlu0 %1780
      %v1782 = vsel %vm1037, %v1774, -inf
      %1783 = vmax.xlane.f32.xlu0 %v1782
      %v1784 = vpop.xlane.xlu0 %1783
      %v1785 = vsel %vm1037, %v1775, -inf
      %1786 = vmax.xlane.f32.xlu0 %v1785
      %v1787 = vpop.xlane.xlu0 %1786
      %v1788 = vsub.f32 %v1772, %v1778
      %v1789 = vsub.f32 %v1773, %v1781
      %v1790 = vsub.f32 %v1774, %v1784
      %v1791 = vsub.f32 %v1775, %v1787
      %v1792 = vmul.f32 %v1788, 1.442695
      %v1793 = vpow.pop %v1792
      %v1794 = vmul.f32 %v1789, 1.442695
      %v1795 = vpow.pop %v1794
      %v1796 = vmul.f32 %v1790, 1.442695
      %v1797 = vpow.pop %v1796
      %v1798 = vmul.f32 %v1791, 1.442695
      %v1799 = vpow.pop %v1798
      %v1800 = vsel %vm1037, %v1793, 0.0
      %1801 = vadd.xlane.f32.xlu0 %v1800
      %v1802 = vpop.xlane.xlu0 %1801
      %v1803 = vsel %vm1037, %v1795, 0.0
      %1804 = vadd.xlane.f32.xlu0 %v1803
      %v1805 = vpop.xlane.xlu0 %1804
      %v1806 = vsel %vm1037, %v1797, 0.0
      %1807 = vadd.xlane.f32.xlu0 %v1806
      %v1808 = vpop.xlane.xlu0 %1807
      %v1809 = vsel %vm1037, %v1799, 0.0
      %1810 = vadd.xlane.f32.xlu0 %v1809
      %v1811 = vpop.xlane.xlu0 %1810
      %v1812 = vrcp.pop %v1802
      %v1813 = vrcp.pop %v1805
      %v1814 = vrcp.pop %v1808
      %v1815 = vrcp.pop %v1811
      %v1816 = vmul.f32 %v1793, %v1812
      %v1817 = vmul.f32 %v1795, %v1813
      %v1818 = vmul.f32 %v1797, %v1814
      %v1819 = vmul.f32 %v1799, %v1815
      %v1820 = vpack.c.bf16 %v1817, %v1816
      %v1821 = vpack.c.bf16 %v1819, %v1818
      %1822 = vrot.lane.b32.xlu0 %v930, 40
      %v1823 = vpop.permute.xlu0 %1822
      %v1826 = vsel %vm1037, %v1820, 0
      %1828 = vmatprep.subr.bf16.mxu0 0
      %1829 = vmatpush1.bf16.msra.mxu0 0
      %1830 = vmatprep.subr.bf16.mxu0 0
      %1831 = vmatpush1.bf16.msra.mxu0 0
      %1832 = vmatprep.subr.bf16.mxu0 0
      %1833 = vmatpush1.bf16.msra.mxu0 0
      %1834 = vmatprep.subr.bf16.mxu0 0
      %1835 = vmatpush1.bf16.msra.mxu0 0
      %1836 = vmatprep.subr.bf16.mxu0 0
      %1837 = vmatpush1.bf16.msra.mxu0 0
      %1838 = vmatprep.subr.bf16.mxu0 0
      %1839 = vmatpush1.bf16.msra.mxu0 0
      %1840 = vmatprep.subr.bf16.mxu0 0
      %1841 = vmatpush1.bf16.msra.mxu0 0
      %1842 = vmatprep.subr.bf16.mxu0 0
      %1843 = vmatpush1.bf16.msra.mxu0 %v1823
      %1844 = vmatprep.subr.bf16.mxu0 0
      %1845 = vmatpush2.bf16.msra.mxu0 0
      %1846 = vmatprep.subr.bf16.mxu0 0
      %1847 = vmatpush2.bf16.msra.mxu0 0
      %1848 = vmatprep.subr.bf16.mxu0 0
      %1849 = vmatpush2.bf16.msra.mxu0 0
      %1850 = vmatprep.subr.bf16.mxu0 0
      %1851 = vmatpush2.bf16.msra.mxu0 0
      %1852 = vmatprep.subr.bf16.mxu0 0
      %1853 = vmatpush2.bf16.msra.mxu0 0
      %1854 = vmatprep.subr.bf16.mxu0 0
      %1855 = vmatpush2.bf16.msra.mxu0 0
      %1856 = vmatprep.subr.bf16.mxu0 0
      %1857 = vmatpush2.bf16.msra.mxu0 0
      %1858 = vmatprep.subr.bf16.mxu0 0
      %1859 = vmatpush2.bf16.msra.mxu0 0
      %1860 = vmatprep.mubr.bf16.mxu0 0
      %1861 = vmatmul.mubr.bf16.gmra.mxu0 %v1826
      %v1862 = vpop.f32.mrf.mxu0
      %v1863 = vadd.f32 0.0, %v1862
      %v1864 = vpop.f32.mrf.mxu0
      %v1865 = vpop.f32.mrf.mxu0
      %v1866 = vadd.f32 0.0, %v1865
      %v1867 = vpop.f32.mrf.mxu0
      %1868 = vdwg.mxu0
      %1869 = vrot.lane.b32.xlu0 %v931, 40
      %v1870 = vpop.permute.xlu0 %1869
      %v1873 = vsel %vm1037, %v1821, 0
      %1875 = vmatprep.subr.bf16.mxu0 0
      %1876 = vmatpush1.bf16.msra.mxu0 0
      %1877 = vmatprep.subr.bf16.mxu0 0
      %1878 = vmatpush1.bf16.msra.mxu0 0
      %1879 = vmatprep.subr.bf16.mxu0 0
      %1880 = vmatpush1.bf16.msra.mxu0 0
      %1881 = vmatprep.subr.bf16.mxu0 0
      %1882 = vmatpush1.bf16.msra.mxu0 0
      %1883 = vmatprep.subr.bf16.mxu0 0
      %1884 = vmatpush1.bf16.msra.mxu0 0
      %1885 = vmatprep.subr.bf16.mxu0 0
      %1886 = vmatpush1.bf16.msra.mxu0 0
      %1887 = vmatprep.subr.bf16.mxu0 0
      %1888 = vmatpush1.bf16.msra.mxu0 0
      %1889 = vmatprep.subr.bf16.mxu0 0
      %1890 = vmatpush1.bf16.msra.mxu0 %v1870
      %1891 = vmatprep.subr.bf16.mxu0 0
      %1892 = vmatpush2.bf16.msra.mxu0 0
      %1893 = vmatprep.subr.bf16.mxu0 0
      %1894 = vmatpush2.bf16.msra.mxu0 0
      %1895 = vmatprep.subr.bf16.mxu0 0
      %1896 = vmatpush2.bf16.msra.mxu0 0
      %1897 = vmatprep.subr.bf16.mxu0 0
      %1898 = vmatpush2.bf16.msra.mxu0 0
      %1899 = vmatprep.subr.bf16.mxu0 0
      %1900 = vmatpush2.bf16.msra.mxu0 0
      %1901 = vmatprep.subr.bf16.mxu0 0
      %1902 = vmatpush2.bf16.msra.mxu0 0
      %1903 = vmatprep.subr.bf16.mxu0 0
      %1904 = vmatpush2.bf16.msra.mxu0 0
      %1905 = vmatprep.subr.bf16.mxu0 0
      %1906 = vmatpush2.bf16.msra.mxu0 0
      %1907 = vmatprep.mubr.bf16.mxu0 0
      %1908 = vmatmul.mubr.bf16.gmra.mxu0 %v1873
      %v1909 = vpop.f32.mrf.mxu0
      %v1910 = vadd.f32 0.0, %v1909
      %v1911 = vpop.f32.mrf.mxu0
      %v1912 = vpop.f32.mrf.mxu0
      %v1913 = vadd.f32 0.0, %v1912
      %v1914 = vpop.f32.mrf.mxu0
      %1915 = vdwg.mxu0
      %1920 = vrot.lane.b32.xlu0 %v1371, 8
      %v1921 = vpop.permute.xlu0 %1920
      %1922 = vrot.lane.b32.xlu0 %v1374, 8
      %v1923 = vpop.permute.xlu0 %1922
      %1924 = vrot.lane.b32.xlu0 %v1418, 8
      %v1925 = vpop.permute.xlu0 %1924
      %1926 = vrot.lane.b32.xlu0 %v1421, 8
      %v1927 = vpop.permute.xlu0 %1926
      %1936 = vrot.lane.b32.xlu0 %v1617, 16
      %v1937 = vpop.permute.xlu0 %1936
      %1938 = vrot.lane.b32.xlu0 %v1620, 16
      %v1939 = vpop.permute.xlu0 %1938
      %1940 = vrot.lane.b32.xlu0 %v1664, 16
      %v1941 = vpop.permute.xlu0 %1940
      %1942 = vrot.lane.b32.xlu0 %v1667, 16
      %v1943 = vpop.permute.xlu0 %1942
      %1952 = vrot.lane.b32.xlu0 %v1863, 24
      %v1953 = vpop.permute.xlu0 %1952
      %1954 = vrot.lane.b32.xlu0 %v1866, 24
      %v1955 = vpop.permute.xlu0 %1954
      %1956 = vrot.lane.b32.xlu0 %v1910, 24
      %v1957 = vpop.permute.xlu0 %1956
      %1958 = vrot.lane.b32.xlu0 %v1913, 24
      %v1959 = vpop.permute.xlu0 %1958
      %v1964 = vsel %vm935, %v1125, %v1921
      %v1965 = vsel %vm935, %v1128, %v1923
      %v1966 = vsel %vm935, %v1172, %v1925
      %v1967 = vsel %vm935, %v1175, %v1927
      %v1968 = vsel %vm1037, %v1964, %v1937
      %v1969 = vsel %vm1037, %v1965, %v1939
      %v1970 = vsel %vm1037, %v1966, %v1941
      %v1971 = vsel %vm1037, %v1967, %v1943
      %vm1972 = vcmask 195584
      %v1973 = vsel %vm1972, %v1968, %v1953
      %v1974 = vsel %vm1972, %v1969, %v1955
      %v1975 = vsel %vm1972, %v1970, %v1957
      %v1976 = vsel %vm1972, %v1971, %v1959
      %v1977 = vpack.c.bf16 %v1974, %v1973
      %v1978 = vpack.c.bf16 %v1976, %v1975
      %v1979 = vld [vmem:[%s722] sm:$0xf]
      %v1980 = vld [vmem:[%s722 + $0x4] sm:$0xf]
      %v1981 = vld [vmem:[%s722 + $0x8] sm:$0xf]
      %v1982 = vld [vmem:[%s722 + $0xc] sm:$0xf]
      %v1983 = vld [vmem:[%s725] sm:$0x1]
      %v1985 = vlaneseq
      %v1986 = vshrl.u32 %v1985, 7
      %v1987 = vsub.s32 0, %v1986
      %v1988 = vrot.slane %v1983, %v1987
      %v1994 = vunpack.c.l.b16 %v1979
      %v1995 = vunpack.c.l.b16 %v1980
      %v1996 = vunpack.c.l.b16 %v1981
      %v1997 = vunpack.c.l.b16 %v1982
      %v1998 = vpack.c.b16 %v1995, %v1994
      %v1999 = vpack.c.b16 %v1997, %v1996
      %v2003 = vsel %vm874, %v1977, 0
      %v2006 = vsel %vm874, %v1978, 0
      %2008 = vmatprep.subr.bf16.mxu0 0
      %2009 = vmatpush1.bf16.msra.mxu0 0
      %2010 = vmatprep.subr.bf16.mxu0 0
      %2011 = vmatpush1.bf16.msra.mxu0 0
      %2012 = vmatprep.subr.bf16.mxu0 0
      %2013 = vmatpush1.bf16.msra.mxu0 0
      %2014 = vmatprep.subr.bf16.mxu0 0
      %2015 = vmatpush1.bf16.msra.mxu0 0
      %2016 = vmatprep.subr.bf16.mxu0 0
      %2017 = vmatpush1.bf16.msra.mxu0 0
      %2018 = vmatprep.subr.bf16.mxu0 0
      %2019 = vmatpush1.bf16.msra.mxu0 0
      %2020 = vmatprep.subr.bf16.mxu0 0
      %2021 = vmatpush1.bf16.msra.mxu0 %v1999
      %2022 = vmatprep.subr.bf16.mxu0 0
      %2023 = vmatpush1.bf16.msra.mxu0 %v1998
      %2024 = vmatprep.subr.bf16.mxu0 0
      %2025 = vmatpush2.bf16.msra.mxu0 0
      %2026 = vmatprep.subr.bf16.mxu0 0
      %2027 = vmatpush2.bf16.msra.mxu0 0
      %2028 = vmatprep.subr.bf16.mxu0 0
      %2029 = vmatpush2.bf16.msra.mxu0 0
      %2030 = vmatprep.subr.bf16.mxu0 0
      %2031 = vmatpush2.bf16.msra.mxu0 0
      %2032 = vmatprep.subr.bf16.mxu0 0
      %2033 = vmatpush2.bf16.msra.mxu0 0
      %2034 = vmatprep.subr.bf16.mxu0 0
      %2035 = vmatpush2.bf16.msra.mxu0 0
      %2036 = vmatprep.subr.bf16.mxu0 0
      %2037 = vmatpush2.bf16.msra.mxu0 0
      %2038 = vmatprep.subr.bf16.mxu0 0
      %2039 = vmatpush2.bf16.msra.mxu0 0
      %2040 = vmatprep.mubr.bf16.mxu0 0
      %2041 = vmatmul.mubr.bf16.gmra.mxu0 %v2003
      %v2042 = vpop.f32.mrf.mxu0
      %v2043 = vadd.f32 %v1988, %v2042
      %v2044 = vpop.f32.mrf.mxu0
      %v2045 = vpop.f32.mrf.mxu0
      %v2046 = vadd.f32 %v1988, %v2045
      %v2047 = vpop.f32.mrf.mxu0
      %2048 = vmatprep.mubr.bf16.mxu0 0
      %2049 = vmatmul.mubr.bf16.gmra.mxu0 %v2006
      %v2050 = vpop.f32.mrf.mxu0
      %v2051 = vadd.f32 %v1988, %v2050
      %v2052 = vpop.f32.mrf.mxu0
      %v2053 = vpop.f32.mrf.mxu0
      %v2054 = vadd.f32 %v1988, %v2053
      %v2055 = vpop.f32.mrf.mxu0
      %2056 = vdwg.mxu0
      %v2057 = vadd.f32 %v845, %v2043
      %v2058 = vadd.f32 %v846, %v2046
      %v2059 = vadd.f32 %v847, %v2051
      %v2060 = vadd.f32 %v848, %v2054
      %v2061 = vld [vmem:[%s728] sm:$0x1]
      %v2062 = vld [vmem:[%s731] sm:$0x1]
      %v2063 = vsel %vm874, %v2057, 0.0
      %2064 = vadd.xlane.f32.xlu0 %v2063
      %v2065 = vpop.xlane.xlu0 %2064
      %v2066 = vsel %vm874, %v2058, 0.0
      %2067 = vadd.xlane.f32.xlu0 %v2066
      %v2068 = vpop.xlane.xlu0 %2067
      %v2069 = vsel %vm874, %v2059, 0.0
      %2070 = vadd.xlane.f32.xlu0 %v2069
      %v2071 = vpop.xlane.xlu0 %2070
      %v2072 = vsel %vm874, %v2060, 0.0
      %2073 = vadd.xlane.f32.xlu0 %v2072
      %v2074 = vpop.xlane.xlu0 %2073
      %v2075 = vrcp.pop 32.0
      %v2076 = vmul.f32 %v2065, %v2075
      %v2077 = vmul.f32 %v2068, %v2075
      %v2078 = vmul.f32 %v2071, %v2075
      %v2079 = vmul.f32 %v2074, %v2075
      %v2080 = vsub.f32 %v2057, %v2076
      %v2081 = vsub.f32 %v2058, %v2077
      %v2082 = vsub.f32 %v2059, %v2078
      %v2083 = vsub.f32 %v2060, %v2079
      %v2084 = vmul.f32 %v2080, %v2080
      %v2085 = vmul.f32 %v2081, %v2081
      %v2086 = vmul.f32 %v2082, %v2082
      %v2087 = vmul.f32 %v2083, %v2083
      %v2088 = vsel %vm874, %v2084, 0.0
      %2089 = vadd.xlane.f32.xlu0 %v2088
      %v2090 = vpop.xlane.xlu0 %2089
      %v2091 = vsel %vm874, %v2085, 0.0
      %2092 = vadd.xlane.f32.xlu0 %v2091
      %v2093 = vpop.xlane.xlu0 %2092
      %v2094 = vsel %vm874, %v2086, 0.0
      %2095 = vadd.xlane.f32.xlu0 %v2094
      %v2096 = vpop.xlane.xlu0 %2095
      %v2097 = vsel %vm874, %v2087, 0.0
      %2098 = vadd.xlane.f32.xlu0 %v2097
      %v2099 = vpop.xlane.xlu0 %2098
      %v2100 = vmul.f32 %v2090, %v2075
      %v2101 = vmul.f32 %v2093, %v2075
      %v2102 = vmul.f32 %v2096, %v2075
      %v2103 = vmul.f32 %v2099, %v2075
      %v2104 = vadd.f32 %v2100, 1e-05
      %v2105 = vadd.f32 %v2101, 1e-05
      %v2106 = vadd.f32 %v2102, 1e-05
      %v2107 = vadd.f32 %v2103, 1e-05
      %v2108 = vrsqrt.pop %v2104
      %v2109 = vrsqrt.pop %v2105
      %v2110 = vrsqrt.pop %v2106
      %v2111 = vrsqrt.pop %v2107
      %v2112 = vmul.f32 %v2080, %v2108
      %v2113 = vmul.f32 %v2081, %v2109
      %v2114 = vmul.f32 %v2082, %v2110
      %v2115 = vmul.f32 %v2083, %v2111
      %v2117 = vlaneseq
      %v2118 = vshrl.u32 %v2117, 7
      %v2119 = vsub.s32 0, %v2118
      %v2120 = vrot.slane %v2061, %v2119
      %v2122 = vmul.f32 %v2112, %v2120
      %v2123 = vmul.f32 %v2113, %v2120
      %v2124 = vmul.f32 %v2114, %v2120
      %v2125 = vmul.f32 %v2115, %v2120
      %v2127 = vlaneseq
      %v2128 = vshrl.u32 %v2127, 7
      %v2129 = vsub.s32 0, %v2128
      %v2130 = vrot.slane %v2062, %v2129
      %v2132 = vadd.f32 %v2122, %v2130
      %v2133 = vadd.f32 %v2123, %v2130
      %v2134 = vadd.f32 %v2124, %v2130
      %v2135 = vadd.f32 %v2125, %v2130
      %v2136 = vpack.c.bf16 %v2133, %v2132
      %v2137 = vpack.c.bf16 %v2135, %v2134
      %v2138 = vld [vmem:[%s736] sm:$0xf]
      %v2139 = vld [vmem:[%s736 + $0x4] sm:$0xf]
      %v2140 = vld [vmem:[%s736 + $0x8] sm:$0xf]
      %v2141 = vld [vmem:[%s736 + $0xc] sm:$0xf]
      %v2142 = vld [vmem:[%s739] sm:$0x1]
      %v2144 = vlaneseq
      %v2145 = vshrl.u32 %v2144, 7
      %v2146 = vsub.s32 0, %v2145
      %v2147 = vrot.slane %v2142, %v2146
      %v2153 = vunpack.c.l.b16 %v2138
      %v2154 = vunpack.c.l.b16 %v2139
      %v2155 = vunpack.c.l.b16 %v2140
      %v2156 = vunpack.c.l.b16 %v2141
      %v2157 = vpack.c.b16 %v2154, %v2153
      %v2158 = vpack.c.b16 %v2156, %v2155
      %v2162 = vsel %vm874, %v2136, 0
      %v2165 = vsel %vm874, %v2137, 0
      %2167 = vmatprep.subr.bf16.mxu0 0
      %2168 = vmatpush1.bf16.msra.mxu0 0
      %2169 = vmatprep.subr.bf16.mxu0 0
      %2170 = vmatpush1.bf16.msra.mxu0 0
      %2171 = vmatprep.subr.bf16.mxu0 0
      %2172 = vmatpush1.bf16.msra.mxu0 0
      %2173 = vmatprep.subr.bf16.mxu0 0
      %2174 = vmatpush1.bf16.msra.mxu0 0
      %2175 = vmatprep.subr.bf16.mxu0 0
      %2176 = vmatpush1.bf16.msra.mxu0 0
      %2177 = vmatprep.subr.bf16.mxu0 0
      %2178 = vmatpush1.bf16.msra.mxu0 0
      %2179 = vmatprep.subr.bf16.mxu0 0
      %2180 = vmatpush1.bf16.msra.mxu0 %v2158
      %2181 = vmatprep.subr.bf16.mxu0 0
      %2182 = vmatpush1.bf16.msra.mxu0 %v2157
      %2183 = vmatprep.subr.bf16.mxu0 0
      %2184 = vmatpush2.bf16.msra.mxu0 0
      %2185 = vmatprep.subr.bf16.mxu0 0
      %2186 = vmatpush2.bf16.msra.mxu0 0
      %2187 = vmatprep.subr.bf16.mxu0 0
      %2188 = vmatpush2.bf16.msra.mxu0 0
      %2189 = vmatprep.subr.bf16.mxu0 0
      %2190 = vmatpush2.bf16.msra.mxu0 0
      %2191 = vmatprep.subr.bf16.mxu0 0
      %2192 = vmatpush2.bf16.msra.mxu0 0
      %2193 = vmatprep.subr.bf16.mxu0 0
      %2194 = vmatpush2.bf16.msra.mxu0 0
      %2195 = vmatprep.subr.bf16.mxu0 0
      %2196 = vmatpush2.bf16.msra.mxu0 0
      %2197 = vmatprep.subr.bf16.mxu0 0
      %2198 = vmatpush2.bf16.msra.mxu0 0
      %2199 = vmatprep.mubr.bf16.mxu0 0
      %2200 = vmatmul.mubr.bf16.gmra.mxu0 %v2162
      %v2201 = vpop.f32.mrf.mxu0
      %v2202 = vadd.f32 %v2147, %v2201
      %v2203 = vpop.f32.mrf.mxu0
      %v2204 = vpop.f32.mrf.mxu0
      %v2205 = vadd.f32 %v2147, %v2204
      %v2206 = vpop.f32.mrf.mxu0
      %2207 = vmatprep.mubr.bf16.mxu0 0
      %2208 = vmatmul.mubr.bf16.gmra.mxu0 %v2165
      %v2209 = vpop.f32.mrf.mxu0
      %v2210 = vadd.f32 %v2147, %v2209
      %v2211 = vpop.f32.mrf.mxu0
      %v2212 = vpop.f32.mrf.mxu0
      %v2213 = vadd.f32 %v2147, %v2212
      %v2214 = vpop.f32.mrf.mxu0
      %2215 = vdwg.mxu0
      %v2216 = vmax.f32 %v2202, 0.0
      %v2217 = vmax.f32 %v2205, 0.0
      %v2218 = vmax.f32 %v2210, 0.0
      %v2219 = vmax.f32 %v2213, 0.0
      %v2220 = vpack.c.bf16 %v2217, %v2216
      %v2221 = vpack.c.bf16 %v2219, %v2218
      %v2222 = vld [vmem:[%s744] sm:$0xf]
      %v2223 = vld [vmem:[%s744 + $0x4] sm:$0xf]
      %v2224 = vld [vmem:[%s744 + $0x8] sm:$0xf]
      %v2225 = vld [vmem:[%s744 + $0xc] sm:$0xf]
      %v2226 = vld [vmem:[%s744 + $0x10] sm:$0xf]
      %v2227 = vld [vmem:[%s744 + $0x14] sm:$0xf]
      %v2228 = vld [vmem:[%s744 + $0x18] sm:$0xf]
      %v2229 = vld [vmem:[%s744 + $0x1c] sm:$0xf]
      %v2230 = vld [vmem:[%s747] sm:$0x1]
      %v2232 = vlaneseq
      %v2233 = vshrl.u32 %v2232, 7
      %v2234 = vsub.s32 0, %v2233
      %v2235 = vrot.slane %v2230, %v2234
      %v2245 = vunpack.c.l.b16 %v2222
      %v2246 = vunpack.c.l.b16 %v2223
      %v2247 = vunpack.c.l.b16 %v2224
      %v2248 = vunpack.c.l.b16 %v2225
      %v2249 = vunpack.c.l.b16 %v2226
      %v2250 = vunpack.c.l.b16 %v2227
      %v2251 = vunpack.c.l.b16 %v2228
      %v2252 = vunpack.c.l.b16 %v2229
      %v2253 = vpack.c.b16 %v2246, %v2245
      %v2254 = vpack.c.b16 %v2248, %v2247
      %v2255 = vpack.c.b16 %v2250, %v2249
      %v2256 = vpack.c.b16 %v2252, %v2251
      %vm2261 = vcmask 523264
      %v2263 = vsel %vm2261, %v2220, 0
      %v2266 = vsel %vm2261, %v2221, 0
      %2268 = vmatprep.subr.bf16.mxu0 0
      %2269 = vmatpush1.bf16.msra.mxu0 0
      %2270 = vmatprep.subr.bf16.mxu0 0
      %2271 = vmatpush1.bf16.msra.mxu0 0
      %2272 = vmatprep.subr.bf16.mxu0 0
      %2273 = vmatpush1.bf16.msra.mxu0 0
      %2274 = vmatprep.subr.bf16.mxu0 0
      %2275 = vmatpush1.bf16.msra.mxu0 0
      %2276 = vmatprep.subr.bf16.mxu0 0
      %2277 = vmatpush1.bf16.msra.mxu0 %v2256
      %2278 = vmatprep.subr.bf16.mxu0 0
      %2279 = vmatpush1.bf16.msra.mxu0 %v2255
      %2280 = vmatprep.subr.bf16.mxu0 0
      %2281 = vmatpush1.bf16.msra.mxu0 %v2254
      %2282 = vmatprep.subr.bf16.mxu0 0
      %2283 = vmatpush1.bf16.msra.mxu0 %v2253
      %2284 = vmatprep.subr.bf16.mxu0 0
      %2285 = vmatpush2.bf16.msra.mxu0 0
      %2286 = vmatprep.subr.bf16.mxu0 0
      %2287 = vmatpush2.bf16.msra.mxu0 0
      %2288 = vmatprep.subr.bf16.mxu0 0
      %2289 = vmatpush2.bf16.msra.mxu0 0
      %2290 = vmatprep.subr.bf16.mxu0 0
      %2291 = vmatpush2.bf16.msra.mxu0 0
      %2292 = vmatprep.subr.bf16.mxu0 0
      %2293 = vmatpush2.bf16.msra.mxu0 0
      %2294 = vmatprep.subr.bf16.mxu0 0
      %2295 = vmatpush2.bf16.msra.mxu0 0
      %2296 = vmatprep.subr.bf16.mxu0 0
      %2297 = vmatpush2.bf16.msra.mxu0 0
      %2298 = vmatprep.subr.bf16.mxu0 0
      %2299 = vmatpush2.bf16.msra.mxu0 0
      %2300 = vmatprep.mubr.bf16.mxu0 0
      %2301 = vmatmul.mubr.bf16.gmra.mxu0 %v2263
      %v2302 = vpop.f32.mrf.mxu0
      %v2303 = vadd.f32 %v2235, %v2302
      %v2304 = vpop.f32.mrf.mxu0
      %v2305 = vpop.f32.mrf.mxu0
      %v2306 = vadd.f32 %v2235, %v2305
      %v2307 = vpop.f32.mrf.mxu0
      %2308 = vmatprep.mubr.bf16.mxu0 0
      %2309 = vmatmul.mubr.bf16.gmra.mxu0 %v2266
      %v2310 = vpop.f32.mrf.mxu0
      %v2311 = vadd.f32 %v2235, %v2310
      %v2312 = vpop.f32.mrf.mxu0
      %v2313 = vpop.f32.mrf.mxu0
      %v2314 = vadd.f32 %v2235, %v2313
      %v2315 = vpop.f32.mrf.mxu0
      %2316 = vdwg.mxu0
      %v2317 = vadd.f32 %v2132, %v2303
      %v2318 = vadd.f32 %v2133, %v2306
      %v2319 = vadd.f32 %v2134, %v2311
      %v2320 = vadd.f32 %v2135, %v2314
      %v2321 = vld [vmem:[%s750] sm:$0x1]
      %v2322 = vld [vmem:[%s753] sm:$0x1]
      %v2323 = vsel %vm874, %v2317, 0.0
      %2324 = vadd.xlane.f32.xlu0 %v2323
      %v2325 = vpop.xlane.xlu0 %2324
      %v2326 = vsel %vm874, %v2318, 0.0
      %2327 = vadd.xlane.f32.xlu0 %v2326
      %v2328 = vpop.xlane.xlu0 %2327
      %v2329 = vsel %vm874, %v2319, 0.0
      %2330 = vadd.xlane.f32.xlu0 %v2329
      %v2331 = vpop.xlane.xlu0 %2330
      %v2332 = vsel %vm874, %v2320, 0.0
      %2333 = vadd.xlane.f32.xlu0 %v2332
      %v2334 = vpop.xlane.xlu0 %2333
      %v2335 = vmul.f32 %v2325, %v2075
      %v2336 = vmul.f32 %v2328, %v2075
      %v2337 = vmul.f32 %v2331, %v2075
      %v2338 = vmul.f32 %v2334, %v2075
      %v2339 = vsub.f32 %v2317, %v2335
      %v2340 = vsub.f32 %v2318, %v2336
      %v2341 = vsub.f32 %v2319, %v2337
      %v2342 = vsub.f32 %v2320, %v2338
      %v2343 = vmul.f32 %v2339, %v2339
      %v2344 = vmul.f32 %v2340, %v2340
      %v2345 = vmul.f32 %v2341, %v2341
      %v2346 = vmul.f32 %v2342, %v2342
      %v2347 = vsel %vm874, %v2343, 0.0
      %2348 = vadd.xlane.f32.xlu0 %v2347
      %v2349 = vpop.xlane.xlu0 %2348
      %v2350 = vsel %vm874, %v2344, 0.0
      %2351 = vadd.xlane.f32.xlu0 %v2350
      %v2352 = vpop.xlane.xlu0 %2351
      %v2353 = vsel %vm874, %v2345, 0.0
      %2354 = vadd.xlane.f32.xlu0 %v2353
      %v2355 = vpop.xlane.xlu0 %2354
      %v2356 = vsel %vm874, %v2346, 0.0
      %2357 = vadd.xlane.f32.xlu0 %v2356
      %v2358 = vpop.xlane.xlu0 %2357
      %v2359 = vmul.f32 %v2349, %v2075
      %v2360 = vmul.f32 %v2352, %v2075
      %v2361 = vmul.f32 %v2355, %v2075
      %v2362 = vmul.f32 %v2358, %v2075
      %v2363 = vadd.f32 %v2359, 1e-05
      %v2364 = vadd.f32 %v2360, 1e-05
      %v2365 = vadd.f32 %v2361, 1e-05
      %v2366 = vadd.f32 %v2362, 1e-05
      %v2367 = vrsqrt.pop %v2363
      %v2368 = vrsqrt.pop %v2364
      %v2369 = vrsqrt.pop %v2365
      %v2370 = vrsqrt.pop %v2366
      %v2371 = vmul.f32 %v2339, %v2367
      %v2372 = vmul.f32 %v2340, %v2368
      %v2373 = vmul.f32 %v2341, %v2369
      %v2374 = vmul.f32 %v2342, %v2370
      %v2376 = vlaneseq
      %v2377 = vshrl.u32 %v2376, 7
      %v2378 = vsub.s32 0, %v2377
      %v2379 = vrot.slane %v2321, %v2378
      %v2381 = vmul.f32 %v2371, %v2379
      %v2382 = vmul.f32 %v2372, %v2379
      %v2383 = vmul.f32 %v2373, %v2379
      %v2384 = vmul.f32 %v2374, %v2379
      %v2386 = vlaneseq
      %v2387 = vshrl.u32 %v2386, 7
      %v2388 = vsub.s32 0, %v2387
      %v2389 = vrot.slane %v2322, %v2388
      %v2391 = vadd.f32 %v2381, %v2389
      %v2392 = vadd.f32 %v2382, %v2389
      %v2393 = vadd.f32 %v2383, %v2389
      %v2394 = vadd.f32 %v2384, %v2389
      %2395 = vst.msk [vmem:[#allocation2] sm:$0xff] %vm874, %v2391
      %2396 = vst.msk [vmem:[#allocation2 + $0x8] sm:$0xff] %vm874, %v2392
      %2397 = vst.msk [vmem:[#allocation2 + $0x10] sm:$0xff] %vm874, %v2393
      %2398 = vst.msk [vmem:[#allocation2 + $0x18] sm:$0xff] %vm874, %v2394
      %p2399 = scmp.eq.s32.totalorder %s33, 1
      // Predicated region
      $region93: #{tpu_custom_call.1} parent=87 // pred_check
        %p2400 = pneg %p2399
      $region94: #{tpu_custom_call.1} parent=87 // pred_check_branch
        %2402 = sbr.rel (%p2400) target = $region96
      $region95: #{tpu_custom_call.1} parent=87 // pred_region
        %v2403 = vpack.c.bf16 %v2392, %v2391
        %v2404 = vpack.c.bf16 %v2394, %v2393
        %v2405 = vld [vmem:[%s15] sm:$0xf]
        %v2406 = vld [vmem:[%s15 + $0x4] sm:$0xf]
        %v2407 = vld [vmem:[%s15 + $0x8] sm:$0xf]
        %v2408 = vld [vmem:[%s15 + $0xc] sm:$0xf]
        %v2409 = vld [vmem:[%s16] sm:$0x1]
        %v2411 = vlaneseq
        %v2412 = vshrl.u32 %v2411, 7
        %v2413 = vsub.s32 0, %v2412
        %v2414 = vrot.slane %v2409, %v2413
        %v2420 = vunpack.c.l.b16 %v2405
        %v2421 = vunpack.c.l.b16 %v2406
        %v2422 = vunpack.c.l.b16 %v2407
        %v2423 = vunpack.c.l.b16 %v2408
        %v2424 = vpack.c.b16 %v2421, %v2420
        %v2425 = vpack.c.b16 %v2423, %v2422
        %v2429 = vsel %vm874, %v2403, 0
        %v2432 = vsel %vm874, %v2404, 0
        %2434 = vmatprep.subr.bf16.mxu0 0
        %2435 = vmatpush1.bf16.msra.mxu0 0
        %2436 = vmatprep.subr.bf16.mxu0 0
        %2437 = vmatpush1.bf16.msra.mxu0 0
        %2438 = vmatprep.subr.bf16.mxu0 0
        %2439 = vmatpush1.bf16.msra.mxu0 0
        %2440 = vmatprep.subr.bf16.mxu0 0
        %2441 = vmatpush1.bf16.msra.mxu0 0
        %2442 = vmatprep.subr.bf16.mxu0 0
        %2443 = vmatpush1.bf16.msra.mxu0 0
        %2444 = vmatprep.subr.bf16.mxu0 0
        %2445 = vmatpush1.bf16.msra.mxu0 0
        %2446 = vmatprep.subr.bf16.mxu0 0
        %2447 = vmatpush1.bf16.msra.mxu0 %v2425
        %2448 = vmatprep.subr.bf16.mxu0 0
        %2449 = vmatpush1.bf16.msra.mxu0 %v2424
        %2450 = vmatprep.subr.bf16.mxu0 0
        %2451 = vmatpush2.bf16.msra.mxu0 0
        %2452 = vmatprep.subr.bf16.mxu0 0
        %2453 = vmatpush2.bf16.msra.mxu0 0
        %2454 = vmatprep.subr.bf16.mxu0 0
        %2455 = vmatpush2.bf16.msra.mxu0 0
        %2456 = vmatprep.subr.bf16.mxu0 0
        %2457 = vmatpush2.bf16.msra.mxu0 0
        %2458 = vmatprep.subr.bf16.mxu0 0
        %2459 = vmatpush2.bf16.msra.mxu0 0
        %2460 = vmatprep.subr.bf16.mxu0 0
        %2461 = vmatpush2.bf16.msra.mxu0 0
        %2462 = vmatprep.subr.bf16.mxu0 0
        %2463 = vmatpush2.bf16.msra.mxu0 0
        %2464 = vmatprep.subr.bf16.mxu0 0
        %2465 = vmatpush2.bf16.msra.mxu0 0
        %2466 = vmatprep.mubr.bf16.mxu0 0
        %2467 = vmatmul.mubr.bf16.gmra.mxu0 %v2429
        %v2468 = vpop.f32.mrf.mxu0
        %v2469 = vadd.f32 %v2414, %v2468
        %v2470 = vpop.f32.mrf.mxu0
        %v2471 = vpop.f32.mrf.mxu0
        %v2472 = vadd.f32 %v2414, %v2471
        %v2473 = vpop.f32.mrf.mxu0
        %2474 = vmatprep.mubr.bf16.mxu0 0
        %2475 = vmatmul.mubr.bf16.gmra.mxu0 %v2432
        %v2476 = vpop.f32.mrf.mxu0
        %v2477 = vadd.f32 %v2414, %v2476
        %v2478 = vpop.f32.mrf.mxu0
        %v2479 = vpop.f32.mrf.mxu0
        %v2480 = vadd.f32 %v2414, %v2479
        %v2481 = vpop.f32.mrf.mxu0
        %2482 = vdwg.mxu0
        %vm2483 = vcmask 31744
        %2484 = vst.msk [vmem:[%s759] sm:$0xff] %vm2483, %v2469
        %2485 = vst.msk [vmem:[%s759 + $0x8] sm:$0xff] %vm2483, %v2472
        %2486 = vst.msk [vmem:[%s759 + $0x10] sm:$0xff] %vm2483, %v2477
        %2487 = vst.msk [vmem:[%s759 + $0x18] sm:$0xff] %vm2483, %v2480
      $region96: #{tpu_custom_call.1} parent=87 // pred_fallthru
        _
      %s2488 = smul.u32 2, %s32
      %p2489 = scmp.lt.s32.totalorder %s2488, 1
      %s2490 = scalar_select %p2489, %s2488, 1
      %s2491 = smul.addr %s2490, 2
      %s2492 = smul.addr %s2491, 8
      %s2493 = scalar_lea.vmem %s17, %s2492
      // Predicated region
      $region97: #{tpu_custom_call.1} parent=87 // pred_check
        %p2494 = pneg %p480
      $region98: #{tpu_custom_call.1} parent=87 // pred_check_branch
        %2496 = sbr.rel (%p2494) target = $region100
      $region99: #{tpu_custom_call.1} parent=87 // pred_region
        %s2497 = smul.u32 2, %s32
      $region100: #{tpu_custom_call.1} parent=87 // pred_fallthru
        _
      // Predicated region
      $region101: #{tpu_custom_call.1} parent=87 // pred_check
        %p2498 = pneg %p480
      $region102: #{tpu_custom_call.1} parent=87 // pred_check_branch
        %2500 = sbr.rel (%p2498) target = $region104
      $region103: #{tpu_custom_call.1} parent=87 // pred_region
        %s2501 = smul.u32 2, %s32
        %p2502 = scmp.lt.s32.totalorder %s2501, 1
        %s2503 = scalar_select %p2502, %s2501, 1
        %s2504 = smul.addr %s2503, 2
        %s2505 = smul.addr %s2504, 8
        %s2506 = scalar_lea.vmem %s17, %s2505
      $region104: #{tpu_custom_call.1} parent=87 // pred_fallthru
        _
    $region88: #{tpu_custom_call.1} parent=5 // pred_fallthru
      _
    %p2507 = scmp.le.s32.totalorder 2, %s23
    // Predicated region
    $region105: #{tpu_custom_call.1} parent=5 // pred_check
      %p2508 = pneg %p2507
    $region106: #{tpu_custom_call.1} parent=5 // pred_check_branch
      %2510 = sbr.rel (%p2508) target = $region108
    $region107: #{tpu_custom_call.1} parent=5 // pred_region
      %s2511 = ssub.s32 %s23, 2
    $region108: #{tpu_custom_call.1} parent=5 // pred_fallthru
      _
  $region6: #{tpu_custom_call.1} parent=0 // loop_footer
    %s27 = sadd.s32 1, %s23
  $region7: #{tpu_custom_call.1} parent=0 // loop_footer_branch
    %22 = sbr.rel target = $region3
  $region8: #{tpu_custom_call.1} parent=0 // loop_exit
    _

</llo_original>
